<compile_context>
chip_gen: v7x
topology: tpu7x:2x2x1
jax: 0.10.0
libtpu: 0.0.40
codegen_flags: <defaults>
</compile_context>

<pallas_src>
import functools

import jax
import jax.numpy as jnp
import numpy as np
from jax.experimental import pallas as pl
from jax.experimental.pallas import tpu as pltpu

LANE = 128


def _round_up(v, m):
    return (v + m - 1) // m * m


def _pick_vmem_limit_bytes():
    """~100 MiB on v5e/v6e (128 MiB physical VMEM), ~56 MiB on v7x (64 MiB)."""
    try:
        cap = getattr(pltpu.get_tpu_info(), "vmem_capacity_bytes", None)
    except Exception:
        cap = None
    if cap is not None and cap >= 128 * 1024 * 1024:
        return 100 * 1024 * 1024
    return 56 * 1024 * 1024


def _pick_tm(n_p, f_in_p, f_out_p, vmem_limit_bytes):
    """Largest row tile whose double-buffered A tiles + resident x fit VMEM."""
    for tm in (512, 256, 128):
        if tm > n_p or n_p % tm != 0:
            continue
        need = (2 * tm * n_p * 2          # double-buffered (TM, Np) bf16 A tiles
                + n_p * f_in_p * 2        # resident node features (bf16)
                + 2 * tm * f_out_p * 4    # double-buffered output tiles (f32 worst)
                + (2 << 20))              # weights / bias / headroom
        if need <= (vmem_limit_bytes * 3) // 4:
            return tm
    return 128


def _sage_layer_kernel(a_ref, x_ref, wl_ref, wr_ref, b_ref, o_ref, *, tm, relu):
    # a_ref : (TM, Np)    bf16 row tile of the row-normalized adjacency (streamed)
    # x_ref : (Np, Fin)   bf16 full node features (resident; constant index_map)
    # wl/wr : (Fin, Fout) bf16 ; b_ref : (1, Fout) f32
    # o_ref : (TM, Fout)
    agg = jnp.dot(a_ref[...], x_ref[...], preferred_element_type=jnp.float32)
    row0 = pl.multiple_of(pl.program_id(0) * tm, tm)
    x_self = x_ref[pl.ds(row0, tm), :]                   # self features of this row tile
    out = (jnp.dot(agg.astype(jnp.bfloat16), wl_ref[...],
                   preferred_element_type=jnp.float32)
           + jnp.dot(x_self, wr_ref[...], preferred_element_type=jnp.float32)
           + b_ref[...])                                 # f32 epilogue
    if relu:
        out = jnp.maximum(out, 0.0)
    o_ref[...] = out.astype(o_ref.dtype)                 # lane-dense store


def _sage_layer(a_p, x_p, w_l, w_r, b, *, relu, out_dtype, tm, vmem_limit_bytes):
    n_p = a_p.shape[0]
    f_in_p = x_p.shape[1]
    f_out_p = w_l.shape[1]
    nb = n_p // tm
    out_itemsize = 2 if out_dtype == jnp.bfloat16 else 4

    flops = 2 * n_p * n_p * f_in_p + 2 * 2 * n_p * f_in_p * f_out_p
    bytes_accessed = ((a_p.size + x_p.size + w_l.size + w_r.size) * 2
                      + b.size * 4 + n_p * f_out_p * out_itemsize)

    return pl.pallas_call(
        functools.partial(_sage_layer_kernel, tm=tm, relu=relu),
        out_shape=jax.ShapeDtypeStruct((n_p, f_out_p), out_dtype),
        grid=(nb,),
        in_specs=[
            pl.BlockSpec((tm, n_p), lambda i: (i, 0)),        # stream A row tiles
            pl.BlockSpec((n_p, f_in_p), lambda i: (0, 0)),    # resident features
            pl.BlockSpec((f_in_p, f_out_p), lambda i: (0, 0)),
            pl.BlockSpec((f_in_p, f_out_p), lambda i: (0, 0)),
            pl.BlockSpec((1, f_out_p), lambda i: (0, 0)),
        ],
        out_specs=pl.BlockSpec((tm, f_out_p), lambda i: (i, 0)),
        compiler_params=pltpu.CompilerParams(
            dimension_semantics=("parallel",),                # 2-TC sharding on v7x
            vmem_limit_bytes=vmem_limit_bytes),
        cost_estimate=pl.CostEstimate(
            flops=flops, transcendentals=0, bytes_accessed=bytes_accessed),
    )(a_p, x_p, w_l, w_r, b)


def build_normalized_adjacency(edge_index, num_nodes):
    """Dense row-normalized adjacency (scatter-mean as a matmul). Plain-JAX glue."""
    src, dst = edge_index[0], edge_index[1]
    counts = jnp.zeros((num_nodes, num_nodes), jnp.float32).at[dst, src].add(1.0)
    deg = counts.sum(axis=1, keepdims=True)
    return counts / jnp.maximum(deg, 1.0)


def graphsage_forward(x, edge_index, params):
    n, f_in = x.shape
    f_hid = params["w_l1"].shape[1]
    f_out = params["w_l2"].shape[1]

    # Lane-align the node dim too: A is square, so n_p is both the lane dim of A
    # and the contraction (K) dim of the A@x aggregation.
    n_p = _round_up(n, LANE)
    f_in_p = _round_up(f_in, LANE)
    f_hid_p = _round_up(f_hid, LANE)
    f_out_p = _round_up(f_out, LANE)

    vmem_limit = _pick_vmem_limit_bytes()
    tm = _pick_tm(n_p, max(f_in_p, f_hid_p), max(f_hid_p, f_out_p), vmem_limit)

    # A / features in bf16 (values in [0,1] / activations); accumulation is f32.
    a = build_normalized_adjacency(edge_index, n)
    a_p = jnp.zeros((n_p, n_p), jnp.bfloat16).at[:n, :n].set(a.astype(jnp.bfloat16))
    x_p = jnp.zeros((n_p, f_in_p), jnp.bfloat16).at[:n, :f_in].set(
        x.astype(jnp.bfloat16))

    def pad_w(w, rows, cols):
        return (jnp.zeros((rows, cols), jnp.float32)
                .at[:w.shape[0], :w.shape[1]].set(w).astype(jnp.bfloat16))

    def pad_b(b, cols):
        return jnp.zeros((1, cols), jnp.float32).at[:, :b.shape[1]].set(b)

    wl1 = pad_w(params["w_l1"], f_in_p, f_hid_p)
    wr1 = pad_w(params["w_r1"], f_in_p, f_hid_p)
    b1 = pad_b(params["b1"], f_hid_p)
    wl2 = pad_w(params["w_l2"], f_hid_p, f_out_p)
    wr2 = pad_w(params["w_r2"], f_hid_p, f_out_p)
    b2 = pad_b(params["b2"], f_out_p)

    # Layer 1 (+ReLU) -> h (bf16, padded). Note: padded node rows of h equal
    # ReLU(b1); this is harmless (A's padded columns are zero and padded output
    # rows are sliced off below) but documented so nothing ever reads them.
    h_p = _sage_layer(a_p, x_p, wl1, wr1, b1, relu=True,
                      out_dtype=jnp.bfloat16, tm=tm, vmem_limit_bytes=vmem_limit)
    out_p = _sage_layer(a_p, h_p, wl2, wr2, b2, relu=False,
                        out_dtype=jnp.float32, tm=tm, vmem_limit_bytes=vmem_limit)
    return out_p[:n, :f_out]


def graphsage_reference(x, edge_index, params):
    """Pure-JAX f32 reference (same semantics as torch SAGEConv mean-agg)."""
    n = x.shape[0]
    a = build_normalized_adjacency(edge_index, n)
    h = jnp.maximum((a @ x) @ params["w_l1"] + x @ params["w_r1"] + params["b1"], 0.0)
    return (a @ h) @ params["w_l2"] + h @ params["w_r2"] + params["b2"]


def init_params(key, in_channels, hidden_channels, out_channels):
    ks = jax.random.split(key, 6)

    def lin(k, fin, fout):
        scale = 1.0 / jnp.sqrt(jnp.float32(fin))
        return jax.random.uniform(k, (fin, fout), jnp.float32, -scale, scale)

    def bias(k, fin, fout):
        scale = 1.0 / jnp.sqrt(jnp.float32(fin))
        return jax.random.uniform(k, (1, fout), jnp.float32, -scale, scale)

    return {
        "w_l1": lin(ks[0], in_channels, hidden_channels),
        "w_r1": lin(ks[1], in_channels, hidden_channels),
        "b1": bias(ks[2], in_channels, hidden_channels),
        "w_l2": lin(ks[3], hidden_channels, out_channels),
        "w_r2": lin(ks[4], hidden_channels, out_channels),
        "b2": bias(ks[5], hidden_channels, out_channels),
    }


if __name__ == "__main__":
    key = jax.random.PRNGKey(0)
    k_x, k_e_src, k_e_dst, k_p = jax.random.split(key, 4)

    num_nodes = 16
    in_channels = 8
    hidden_channels = 32
    out_channels = 16
    num_edges = 40

    x = jax.random.normal(k_x, (num_nodes, in_channels), jnp.float32)
    edge_index = jnp.stack(
        [
            jax.random.randint(k_e_src, (num_edges,), 0, num_nodes),
            jax.random.randint(k_e_dst, (num_edges,), 0, num_nodes),
        ],
        axis=0,
    )  # [2, E], row 0 = source j, row 1 = target i

    params = init_params(k_p, in_channels, hidden_channels, out_channels)

    out = jax.jit(graphsage_forward)(x, edge_index, params)
    out = jax.block_until_ready(out)
    assert out.shape == (num_nodes, out_channels)

    ref = graphsage_reference(x, edge_index, params)
    np.testing.assert_allclose(np.asarray(out), np.asarray(ref), rtol=5e-2, atol=2e-1)

    print("KERNEL_OK")
</pallas_src>

<mosaic_0001>
module attributes {stable_mosaic.version = 11 : i64} {
  func.func @_sage_layer_kernel(%arg0: i32, %arg1: memref<128x128xbf16, #tpu.memory_space<vmem>>, %arg2: memref<128x128xbf16, #tpu.memory_space<vmem>>, %arg3: memref<128x128xbf16, #tpu.memory_space<vmem>>, %arg4: memref<128x128xbf16, #tpu.memory_space<vmem>>, %arg5: memref<1x128xf32, #tpu.memory_space<vmem>>, %arg6: memref<128x128xbf16, #tpu.memory_space<vmem>>) attributes {dimension_semantics = [#tpu.dimension_semantics<parallel>], iteration_bounds = array<i64: 1>, scalar_prefetch = 0 : i64, scratch_operands = 0 : i64, tpu.core_type = #tpu.core_type<tc>, window_params = [{transform_indices = @transform_0, window_bounds = array<i64: 128, 128>}, {pipeline_mode = #tpu.pipeline_mode<synchronous>, transform_indices = @transform_1, window_bounds = array<i64: 128, 128>}, {pipeline_mode = #tpu.pipeline_mode<synchronous>, transform_indices = @transform_2, window_bounds = array<i64: 128, 128>}, {pipeline_mode = #tpu.pipeline_mode<synchronous>, transform_indices = @transform_3, window_bounds = array<i64: 128, 128>}, {pipeline_mode = #tpu.pipeline_mode<synchronous>, transform_indices = @transform_4, window_bounds = array<i64: 1, 128>}, {transform_indices = @transform_5, window_bounds = array<i64: 128, 128>}]} {
    %c0 = arith.constant 0 : index
    %c0_0 = arith.constant 0 : index
    %0 = vector.load %arg1[%c0, %c0_0] : memref<128x128xbf16, #tpu.memory_space<vmem>>, vector<128x128xbf16>
    %c0_1 = arith.constant 0 : index
    %c0_2 = arith.constant 0 : index
    %1 = vector.load %arg2[%c0_1, %c0_2] : memref<128x128xbf16, #tpu.memory_space<vmem>>, vector<128x128xbf16>
    %cst = arith.constant dense<0.000000e+00> : vector<128x128xf32>
    %2 = tpu.matmul %0, %1, %cst {dimension_numbers = #tpu.dot_dimension_numbers<[1], [0], [0], [1], [0, 0, 1, 1], [], []>} : vector<128x128xbf16>, vector<128x128xbf16>, vector<128x128xf32> -> vector<128x128xf32>
    %c128_i32 = arith.constant 128 : i32
    %3 = arith.muli %arg0, %c128_i32 : i32
    %4 = tpu.assume_multiple %3, 128 : i32
    %5 = arith.index_cast %4 : i32 to index
    %c0_3 = arith.constant 0 : index
    %6 = vector.load %arg2[%5, %c0_3] : memref<128x128xbf16, #tpu.memory_space<vmem>>, vector<128x128xbf16>
    %7 = arith.truncf %2 : vector<128x128xf32> to vector<128x128xbf16>
    %c0_4 = arith.constant 0 : index
    %c0_5 = arith.constant 0 : index
    %8 = vector.load %arg3[%c0_4, %c0_5] : memref<128x128xbf16, #tpu.memory_space<vmem>>, vector<128x128xbf16>
    %cst_6 = arith.constant dense<0.000000e+00> : vector<128x128xf32>
    %9 = tpu.matmul %7, %8, %cst_6 {dimension_numbers = #tpu.dot_dimension_numbers<[1], [0], [0], [1], [0, 0, 1, 1], [], []>} : vector<128x128xbf16>, vector<128x128xbf16>, vector<128x128xf32> -> vector<128x128xf32>
    %c0_7 = arith.constant 0 : index
    %c0_8 = arith.constant 0 : index
    %10 = vector.load %arg4[%c0_7, %c0_8] : memref<128x128xbf16, #tpu.memory_space<vmem>>, vector<128x128xbf16>
    %cst_9 = arith.constant dense<0.000000e+00> : vector<128x128xf32>
    %11 = tpu.matmul %6, %10, %cst_9 {dimension_numbers = #tpu.dot_dimension_numbers<[1], [0], [0], [1], [0, 0, 1, 1], [], []>} : vector<128x128xbf16>, vector<128x128xbf16>, vector<128x128xf32> -> vector<128x128xf32>
    %12 = arith.addf %9, %11 : vector<128x128xf32>
    %c0_10 = arith.constant 0 : index
    %c0_11 = arith.constant 0 : index
    %13 = vector.load %arg5[%c0_10, %c0_11] : memref<1x128xf32, #tpu.memory_space<vmem>>, vector<1x128xf32>
    %14 = vector.broadcast %13 : vector<1x128xf32> to vector<128x128xf32>
    %15 = arith.addf %12, %14 : vector<128x128xf32>
    %cst_12 = arith.constant 0.000000e+00 : f32
    %16 = vector.broadcast %cst_12 : f32 to vector<128x128xf32>
    %17 = arith.maximumf %15, %16 : vector<128x128xf32>
    %18 = arith.truncf %17 : vector<128x128xf32> to vector<128x128xbf16>
    %c0_13 = arith.constant 0 : index
    %c0_14 = arith.constant 0 : index
    %19 = vector.load %arg6[%c0_13, %c0_14] : memref<128x128xbf16, #tpu.memory_space<vmem>>, vector<128x128xbf16>
    tpu.vector_store %arg6[%c0_13, %c0_14], %18 {strides = array<i32>} : memref<128x128xbf16, #tpu.memory_space<vmem>>, vector<128x128xbf16>,
    return
  }
  func.func @transform_0(%arg0: i32) -> (i32, i32) {
    %c0_i32 = arith.constant 0 : i32
    %c0_i32_0 = arith.constant 0 : i32
    return %arg0, %c0_i32 : i32, i32
  }
  func.func @transform_1(%arg0: i32) -> (i32, i32) {
    %c0_i32 = arith.constant 0 : i32
    %c0_i32_0 = arith.constant 0 : i32
    %c0_i32_1 = arith.constant 0 : i32
    return %c0_i32, %c0_i32_0 : i32, i32
  }
  func.func @transform_2(%arg0: i32) -> (i32, i32) {
    %c0_i32 = arith.constant 0 : i32
    %c0_i32_0 = arith.constant 0 : i32
    %c0_i32_1 = arith.constant 0 : i32
    return %c0_i32, %c0_i32_0 : i32, i32
  }
  func.func @transform_3(%arg0: i32) -> (i32, i32) {
    %c0_i32 = arith.constant 0 : i32
    %c0_i32_0 = arith.constant 0 : i32
    %c0_i32_1 = arith.constant 0 : i32
    return %c0_i32, %c0_i32_0 : i32, i32
  }
  func.func @transform_4(%arg0: i32) -> (i32, i32) {
    %c0_i32 = arith.constant 0 : i32
    %c0_i32_0 = arith.constant 0 : i32
    %c0_i32_1 = arith.constant 0 : i32
    return %c0_i32, %c0_i32_0 : i32, i32
  }
  func.func @transform_5(%arg0: i32) -> (i32, i32) {
    %c0_i32 = arith.constant 0 : i32
    %c0_i32_0 = arith.constant 0 : i32
    return %arg0, %c0_i32 : i32, i32
  }
}

module attributes {stable_mosaic.version = 11 : i64} {
  func.func @_sage_layer_kernel(%arg0: i32, %arg1: memref<128x128xbf16, #tpu.memory_space<vmem>>, %arg2: memref<128x128xbf16, #tpu.memory_space<vmem>>, %arg3: memref<128x128xbf16, #tpu.memory_space<vmem>>, %arg4: memref<128x128xbf16, #tpu.memory_space<vmem>>, %arg5: memref<1x128xf32, #tpu.memory_space<vmem>>, %arg6: memref<128x128xf32, #tpu.memory_space<vmem>>) attributes {dimension_semantics = [#tpu.dimension_semantics<parallel>], iteration_bounds = array<i64: 1>, scalar_prefetch = 0 : i64, scratch_operands = 0 : i64, tpu.core_type = #tpu.core_type<tc>, window_params = [{transform_indices = @transform_0, window_bounds = array<i64: 128, 128>}, {pipeline_mode = #tpu.pipeline_mode<synchronous>, transform_indices = @transform_1, window_bounds = array<i64: 128, 128>}, {pipeline_mode = #tpu.pipeline_mode<synchronous>, transform_indices = @transform_2, window_bounds = array<i64: 128, 128>}, {pipeline_mode = #tpu.pipeline_mode<synchronous>, transform_indices = @transform_3, window_bounds = array<i64: 128, 128>}, {pipeline_mode = #tpu.pipeline_mode<synchronous>, transform_indices = @transform_4, window_bounds = array<i64: 1, 128>}, {transform_indices = @transform_5, window_bounds = array<i64: 128, 128>}]} {
    %c0 = arith.constant 0 : index
    %c0_0 = arith.constant 0 : index
    %0 = vector.load %arg1[%c0, %c0_0] : memref<128x128xbf16, #tpu.memory_space<vmem>>, vector<128x128xbf16>
    %c0_1 = arith.constant 0 : index
    %c0_2 = arith.constant 0 : index
    %1 = vector.load %arg2[%c0_1, %c0_2] : memref<128x128xbf16, #tpu.memory_space<vmem>>, vector<128x128xbf16>
    %cst = arith.constant dense<0.000000e+00> : vector<128x128xf32>
    %2 = tpu.matmul %0, %1, %cst {dimension_numbers = #tpu.dot_dimension_numbers<[1], [0], [0], [1], [0, 0, 1, 1], [], []>} : vector<128x128xbf16>, vector<128x128xbf16>, vector<128x128xf32> -> vector<128x128xf32>
    %c128_i32 = arith.constant 128 : i32
    %3 = arith.muli %arg0, %c128_i32 : i32
    %4 = tpu.assume_multiple %3, 128 : i32
    %5 = arith.index_cast %4 : i32 to index
    %c0_3 = arith.constant 0 : index
    %6 = vector.load %arg2[%5, %c0_3] : memref<128x128xbf16, #tpu.memory_space<vmem>>, vector<128x128xbf16>
    %7 = arith.truncf %2 : vector<128x128xf32> to vector<128x128xbf16>
    %c0_4 = arith.constant 0 : index
    %c0_5 = arith.constant 0 : index
    %8 = vector.load %arg3[%c0_4, %c0_5] : memref<128x128xbf16, #tpu.memory_space<vmem>>, vector<128x128xbf16>
    %cst_6 = arith.constant dense<0.000000e+00> : vector<128x128xf32>
    %9 = tpu.matmul %7, %8, %cst_6 {dimension_numbers = #tpu.dot_dimension_numbers<[1], [0], [0], [1], [0, 0, 1, 1], [], []>} : vector<128x128xbf16>, vector<128x128xbf16>, vector<128x128xf32> -> vector<128x128xf32>
    %c0_7 = arith.constant 0 : index
    %c0_8 = arith.constant 0 : index
    %10 = vector.load %arg4[%c0_7, %c0_8] : memref<128x128xbf16, #tpu.memory_space<vmem>>, vector<128x128xbf16>
    %cst_9 = arith.constant dense<0.000000e+00> : vector<128x128xf32>
    %11 = tpu.matmul %6, %10, %cst_9 {dimension_numbers = #tpu.dot_dimension_numbers<[1], [0], [0], [1], [0, 0, 1, 1], [], []>} : vector<128x128xbf16>, vector<128x128xbf16>, vector<128x128xf32> -> vector<128x128xf32>
    %12 = arith.addf %9, %11 : vector<128x128xf32>
    %c0_10 = arith.constant 0 : index
    %c0_11 = arith.constant 0 : index
    %13 = vector.load %arg5[%c0_10, %c0_11] : memref<1x128xf32, #tpu.memory_space<vmem>>, vector<1x128xf32>
    %14 = vector.broadcast %13 : vector<1x128xf32> to vector<128x128xf32>
    %15 = arith.addf %12, %14 : vector<128x128xf32>
    %c0_12 = arith.constant 0 : index
    %c0_13 = arith.constant 0 : index
    %16 = vector.load %arg6[%c0_12, %c0_13] : memref<128x128xf32, #tpu.memory_space<vmem>>, vector<128x128xf32>
    tpu.vector_store %arg6[%c0_12, %c0_13], %15 {strides = array<i32>} : memref<128x128xf32, #tpu.memory_space<vmem>>, vector<128x128xf32>,
    return
  }
  func.func @transform_0(%arg0: i32) -> (i32, i32) {
    %c0_i32 = arith.constant 0 : i32
    %c0_i32_0 = arith.constant 0 : i32
    return %arg0, %c0_i32 : i32, i32
  }
  func.func @transform_1(%arg0: i32) -> (i32, i32) {
    %c0_i32 = arith.constant 0 : i32
    %c0_i32_0 = arith.constant 0 : i32
    %c0_i32_1 = arith.constant 0 : i32
    return %c0_i32, %c0_i32_0 : i32, i32
  }
  func.func @transform_2(%arg0: i32) -> (i32, i32) {
    %c0_i32 = arith.constant 0 : i32
    %c0_i32_0 = arith.constant 0 : i32
    %c0_i32_1 = arith.constant 0 : i32
    return %c0_i32, %c0_i32_0 : i32, i32
  }
  func.func @transform_3(%arg0: i32) -> (i32, i32) {
    %c0_i32 = arith.constant 0 : i32
    %c0_i32_0 = arith.constant 0 : i32
    %c0_i32_1 = arith.constant 0 : i32
    return %c0_i32, %c0_i32_0 : i32, i32
  }
  func.func @transform_4(%arg0: i32) -> (i32, i32) {
    %c0_i32 = arith.constant 0 : i32
    %c0_i32_0 = arith.constant 0 : i32
    %c0_i32_1 = arith.constant 0 : i32
    return %c0_i32, %c0_i32_0 : i32, i32
  }
  func.func @transform_5(%arg0: i32) -> (i32, i32) {
    %c0_i32 = arith.constant 0 : i32
    %c0_i32_0 = arith.constant 0 : i32
    return %arg0, %c0_i32 : i32, i32
  }
}

</mosaic_0001>

<llo_original>
// kernel: graphsage_forward.3
$region0: #{graphsage_forward.3}
  #allocation0 [shape = 'u32[]', space=smem, size = 0x4, offset = 0x4, fixed_abs, tag = 'smem constant byte address 0x4 - core index']
  #allocation1 [shape = 'u32[144,128]{1,0:T(1,128)}', space=vmem, size = 0x12000, scoped, tag = 'internal scratch']
  %s0 = inlined_call_operand.vmem [shape: bf16[128,128], index: 0, kind: input, shape index: {}]
  %s1 = inlined_call_operand.vmem [shape: bf16[128,128], index: 1, kind: input, shape index: {}]
  %s2 = inlined_call_operand.vmem [shape: bf16[128,128], index: 2, kind: input, shape index: {}]
  %s3 = inlined_call_operand.vmem [shape: bf16[128,128], index: 3, kind: input, shape index: {}]
  %s4 = inlined_call_operand.vmem [shape: f32[1,128], index: 4, kind: input, shape index: {}]
  %s5 = inlined_call_operand.vmem [shape: f32[128,128], index: 5, kind: output, shape index: {}]
  %s6 = sld [smem:[#allocation0]]
  $region30: #{graphsage_forward.3} parent=0
    _
  %s8 = ssub.s32 1, %s6
  %s9 = scalar_select 0, %s8, %s6
  // Predicated region
  $region2: #{graphsage_forward.3} parent=0 // pred_check
    _
  $region3: #{graphsage_forward.3} parent=0 // pred_check_branch
    %11 = sbr.rel (0) target = $region5
  $region4: #{graphsage_forward.3} parent=0 // pred_region
    _
  $region5: #{graphsage_forward.3} parent=0 // pred_fallthru
    _
  // Predicated region
  $region6: #{graphsage_forward.3} parent=0 // pred_check
    _
  $region7: #{graphsage_forward.3} parent=0 // pred_check_branch
    %13 = sbr.rel (0) target = $region9
  $region8: #{graphsage_forward.3} parent=0 // pred_region
    _
  $region9: #{graphsage_forward.3} parent=0 // pred_fallthru
    _
  // Predicated region
  $region10: #{graphsage_forward.3} parent=0 // pred_check
    _
  $region11: #{graphsage_forward.3} parent=0 // pred_check_branch
    %15 = sbr.rel (0) target = $region13
  $region12: #{graphsage_forward.3} parent=0 // pred_region
    _
  $region13: #{graphsage_forward.3} parent=0 // pred_fallthru
    _
  // Predicated region
  $region14: #{graphsage_forward.3} parent=0 // pred_check
    _
  $region15: #{graphsage_forward.3} parent=0 // pred_check_branch
    %17 = sbr.rel (0) target = $region17
  $region16: #{graphsage_forward.3} parent=0 // pred_region
    _
  $region17: #{graphsage_forward.3} parent=0 // pred_fallthru
    _
  // Predicated region
  $region18: #{graphsage_forward.3} parent=0 // pred_check
    _
  $region19: #{graphsage_forward.3} parent=0 // pred_check_branch
    %19 = sbr.rel (0) target = $region21
  $region20: #{graphsage_forward.3} parent=0 // pred_region
    _
  $region21: #{graphsage_forward.3} parent=0 // pred_fallthru
    _
  %v21 = vld [vmem:[%s0] sm:$0xf]
  %v22 = vld [vmem:[%s0 + $0x4] sm:$0xf]
  %v23 = vld [vmem:[%s0 + $0x8] sm:$0xf]
  %v24 = vld [vmem:[%s0 + $0xc] sm:$0xf]
  %v25 = vld [vmem:[%s0 + $0x10] sm:$0xf]
  %v26 = vld [vmem:[%s0 + $0x14] sm:$0xf]
  %v27 = vld [vmem:[%s0 + $0x18] sm:$0xf]
  %v28 = vld [vmem:[%s0 + $0x1c] sm:$0xf]
  %v29 = vld [vmem:[%s0 + $0x20] sm:$0xf]
  %v30 = vld [vmem:[%s0 + $0x24] sm:$0xf]
  %v31 = vld [vmem:[%s0 + $0x28] sm:$0xf]
  %v32 = vld [vmem:[%s0 + $0x2c] sm:$0xf]
  %v33 = vld [vmem:[%s0 + $0x30] sm:$0xf]
  %v34 = vld [vmem:[%s0 + $0x34] sm:$0xf]
  %v35 = vld [vmem:[%s0 + $0x38] sm:$0xf]
  %v36 = vld [vmem:[%s0 + $0x3c] sm:$0xf]
  %v37 = vld [vmem:[%s1] sm:$0xf]
  %v38 = vld [vmem:[%s1 + $0x4] sm:$0xf]
  %v39 = vld [vmem:[%s1 + $0x8] sm:$0xf]
  %v40 = vld [vmem:[%s1 + $0xc] sm:$0xf]
  %v41 = vld [vmem:[%s1 + $0x10] sm:$0xf]
  %v42 = vld [vmem:[%s1 + $0x14] sm:$0xf]
  %v43 = vld [vmem:[%s1 + $0x18] sm:$0xf]
  %v44 = vld [vmem:[%s1 + $0x1c] sm:$0xf]
  %v45 = vld [vmem:[%s1 + $0x20] sm:$0xf]
  %v46 = vld [vmem:[%s1 + $0x24] sm:$0xf]
  %v47 = vld [vmem:[%s1 + $0x28] sm:$0xf]
  %v48 = vld [vmem:[%s1 + $0x2c] sm:$0xf]
  %v49 = vld [vmem:[%s1 + $0x30] sm:$0xf]
  %v50 = vld [vmem:[%s1 + $0x34] sm:$0xf]
  %v51 = vld [vmem:[%s1 + $0x38] sm:$0xf]
  %v52 = vld [vmem:[%s1 + $0x3c] sm:$0xf]
  %v69 = vunpack.c.l.b16 %v21
  %v70 = vunpack.c.l.b16 %v22
  %v71 = vunpack.c.l.b16 %v23
  %v72 = vunpack.c.l.b16 %v24
  %v73 = vunpack.c.l.b16 %v25
  %v74 = vunpack.c.l.b16 %v26
  %v75 = vunpack.c.l.b16 %v27
  %v76 = vunpack.c.l.b16 %v28
  %v77 = vunpack.c.l.b16 %v29
  %v78 = vunpack.c.l.b16 %v30
  %v79 = vunpack.c.l.b16 %v31
  %v80 = vunpack.c.l.b16 %v32
  %v81 = vunpack.c.l.b16 %v33
  %v82 = vunpack.c.l.b16 %v34
  %v83 = vunpack.c.l.b16 %v35
  %v84 = vunpack.c.l.b16 %v36
  %v85 = vpack.c.b16 %v70, %v69
  %v86 = vpack.c.b16 %v72, %v71
  %v87 = vpack.c.b16 %v74, %v73
  %v88 = vpack.c.b16 %v76, %v75
  %v89 = vpack.c.b16 %v78, %v77
  %v90 = vpack.c.b16 %v80, %v79
  %v91 = vpack.c.b16 %v82, %v81
  %v92 = vpack.c.b16 %v84, %v83
  %v117 = vunpack.c.l.b16 %v37
  %v118 = vunpack.c.l.b16 %v38
  %v119 = vunpack.c.l.b16 %v39
  %v120 = vunpack.c.l.b16 %v40
  %v121 = vunpack.c.l.b16 %v41
  %v122 = vunpack.c.l.b16 %v42
  %v123 = vunpack.c.l.b16 %v43
  %v124 = vunpack.c.l.b16 %v44
  %v125 = vunpack.c.l.b16 %v45
  %v126 = vunpack.c.l.b16 %v46
  %v127 = vunpack.c.l.b16 %v47
  %v128 = vunpack.c.l.b16 %v48
  %v129 = vunpack.c.l.b16 %v49
  %v130 = vunpack.c.l.b16 %v50
  %v131 = vunpack.c.l.b16 %v51
  %v132 = vunpack.c.l.b16 %v52
  %v133 = vpack.c.b16 %v118, %v117
  %v134 = vpack.c.b16 %v120, %v119
  %v135 = vpack.c.b16 %v122, %v121
  %v136 = vpack.c.b16 %v124, %v123
  %v137 = vpack.c.b16 %v126, %v125
  %v138 = vpack.c.b16 %v128, %v127
  %v139 = vpack.c.b16 %v130, %v129
  %v140 = vpack.c.b16 %v132, %v131
  %149 = vmatprep.subr.bf16.mxu0 0
  %150 = vmatpush1.bf16.msra.mxu0 %v133
  %151 = vmatprep.subr.bf16.mxu0 0
  %152 = vmatpush1.bf16.msra.mxu0 %v134
  %153 = vmatprep.subr.bf16.mxu0 0
  %154 = vmatpush1.bf16.msra.mxu0 %v135
  %155 = vmatprep.subr.bf16.mxu0 0
  %156 = vmatpush1.bf16.msra.mxu0 %v136
  %157 = vmatprep.subr.bf16.mxu0 0
  %158 = vmatpush1.bf16.msra.mxu0 %v137
  %159 = vmatprep.subr.bf16.mxu0 0
  %160 = vmatpush1.bf16.msra.mxu0 %v138
  %161 = vmatprep.subr.bf16.mxu0 0
  %162 = vmatpush1.bf16.msra.mxu0 %v139
  %163 = vmatprep.subr.bf16.mxu0 0
  %164 = vmatpush1.bf16.msra.mxu0 %v140
  %165 = vmatprep.subr.bf16.mxu0 0
  %166 = vmatpush1.bf16.msra.mxu0 0
  %167 = vmatprep.subr.bf16.mxu0 0
  %168 = vmatpush1.bf16.msra.mxu0 0
  %169 = vmatprep.subr.bf16.mxu0 0
  %170 = vmatpush1.bf16.msra.mxu0 0
  %171 = vmatprep.subr.bf16.mxu0 0
  %172 = vmatpush1.bf16.msra.mxu0 0
  %173 = vmatprep.subr.bf16.mxu0 0
  %174 = vmatpush1.bf16.msra.mxu0 0
  %175 = vmatprep.subr.bf16.mxu0 0
  %176 = vmatpush1.bf16.msra.mxu0 0
  %177 = vmatprep.subr.bf16.mxu0 0
  %178 = vmatpush1.bf16.msra.mxu0 0
  %179 = vmatprep.subr.bf16.mxu0 0
  %180 = vmatpush1.bf16.msra.mxu0 0
  %181 = vmatprep.mubr.bf16.mxu0 0
  %182 = vmatmul.mubr.bf16.gmra.mrb[0].mxu0 %v85
  %v183 = vpop.f32.mrb[0].mxu0
  %v184 = vadd.f32 0.0, %v183
  %v185 = vpop.f32.mrb[0].mxu0
  %v186 = vpop.f32.mrb[0].mxu0
  %v187 = vadd.f32 0.0, %v186
  %v188 = vpop.f32.mrb[0].mxu0
  %189 = vmatprep.mubr.bf16.mxu0 0
  %190 = vmatmul.mubr.bf16.gmra.mrb[0].mxu0 %v86
  %v191 = vpop.f32.mrb[0].mxu0
  %v192 = vadd.f32 0.0, %v191
  %v193 = vpop.f32.mrb[0].mxu0
  %v194 = vpop.f32.mrb[0].mxu0
  %v195 = vadd.f32 0.0, %v194
  %v196 = vpop.f32.mrb[0].mxu0
  %197 = vmatprep.mubr.bf16.mxu0 0
  %198 = vmatmul.mubr.bf16.gmra.mrb[0].mxu0 %v87
  %v199 = vpop.f32.mrb[0].mxu0
  %v200 = vadd.f32 0.0, %v199
  %v201 = vpop.f32.mrb[0].mxu0
  %v202 = vpop.f32.mrb[0].mxu0
  %v203 = vadd.f32 0.0, %v202
  %v204 = vpop.f32.mrb[0].mxu0
  %205 = vmatprep.mubr.bf16.mxu0 0
  %206 = vmatmul.mubr.bf16.gmra.mrb[0].mxu0 %v88
  %v207 = vpop.f32.mrb[0].mxu0
  %v208 = vadd.f32 0.0, %v207
  %v209 = vpop.f32.mrb[0].mxu0
  %v210 = vpop.f32.mrb[0].mxu0
  %v211 = vadd.f32 0.0, %v210
  %v212 = vpop.f32.mrb[0].mxu0
  %213 = vmatprep.mubr.bf16.mxu0 0
  %214 = vmatmul.mubr.bf16.gmra.mrb[0].mxu0 %v89
  %v215 = vpop.f32.mrb[0].mxu0
  %v216 = vadd.f32 0.0, %v215
  %v217 = vpop.f32.mrb[0].mxu0
  %v218 = vpop.f32.mrb[0].mxu0
  %v219 = vadd.f32 0.0, %v218
  %v220 = vpop.f32.mrb[0].mxu0
  %221 = vmatprep.mubr.bf16.mxu0 0
  %222 = vmatmul.mubr.bf16.gmra.mrb[0].mxu0 %v90
  %v223 = vpop.f32.mrb[0].mxu0
  %v224 = vadd.f32 0.0, %v223
  %v225 = vpop.f32.mrb[0].mxu0
  %v226 = vpop.f32.mrb[0].mxu0
  %v227 = vadd.f32 0.0, %v226
  %v228 = vpop.f32.mrb[0].mxu0
  %229 = vmatprep.mubr.bf16.mxu0 0
  %230 = vmatmul.mubr.bf16.gmra.mrb[0].mxu0 %v91
  %v231 = vpop.f32.mrb[0].mxu0
  %v232 = vadd.f32 0.0, %v231
  %v233 = vpop.f32.mrb[0].mxu0
  %v234 = vpop.f32.mrb[0].mxu0
  %v235 = vadd.f32 0.0, %v234
  %v236 = vpop.f32.mrb[0].mxu0
  %237 = vmatprep.mubr.bf16.mxu0 0
  %238 = vmatmul.mubr.bf16.gmra.mrb[0].mxu0 %v92
  %v239 = vpop.f32.mrb[0].mxu0
  %v240 = vadd.f32 0.0, %v239
  %v241 = vpop.f32.mrb[0].mxu0
  %v242 = vpop.f32.mrb[0].mxu0
  %v243 = vadd.f32 0.0, %v242
  %v244 = vpop.f32.mrb[0].mxu0
  %245 = vdwg.mxu0
  %s246 = smul.u32 0, 128
  %s247 = sshra.s32 %s246, 3
  %s248 = sand.u32 %s246, 7
  %s249 = smul.addr %s247, 4
  %s250 = scalar_lea.vmem %s1, %s249
  %v251 = vld [vmem:[%s250] sm:$0xf]
  %v252 = vld [vmem:[%s250 + $0x4] sm:$0xf]
  %v253 = vld [vmem:[%s250 + $0x8] sm:$0xf]
  %v254 = vld [vmem:[%s250 + $0xc] sm:$0xf]
  %v255 = vld [vmem:[%s250 + $0x10] sm:$0xf]
  %v256 = vld [vmem:[%s250 + $0x14] sm:$0xf]
  %v257 = vld [vmem:[%s250 + $0x18] sm:$0xf]
  %v258 = vld [vmem:[%s250 + $0x1c] sm:$0xf]
  %v259 = vld [vmem:[%s250 + $0x20] sm:$0xf]
  %v260 = vld [vmem:[%s250 + $0x24] sm:$0xf]
  %v261 = vld [vmem:[%s250 + $0x28] sm:$0xf]
  %v262 = vld [vmem:[%s250 + $0x2c] sm:$0xf]
  %v263 = vld [vmem:[%s250 + $0x30] sm:$0xf]
  %v264 = vld [vmem:[%s250 + $0x34] sm:$0xf]
  %v265 = vld [vmem:[%s250 + $0x38] sm:$0xf]
  %v266 = vld [vmem:[%s250 + $0x3c] sm:$0xf]
  %v267 = vpack.c.bf16 %v187, %v184
  %v268 = vpack.c.bf16 %v195, %v192
  %v269 = vpack.c.bf16 %v203, %v200
  %v270 = vpack.c.bf16 %v211, %v208
  %v271 = vpack.c.bf16 %v219, %v216
  %v272 = vpack.c.bf16 %v227, %v224
  %v273 = vpack.c.bf16 %v235, %v232
  %v274 = vpack.c.bf16 %v243, %v240
  %v275 = vld [vmem:[%s2] sm:$0xf]
  %v276 = vld [vmem:[%s2 + $0x4] sm:$0xf]
  %v277 = vld [vmem:[%s2 + $0x8] sm:$0xf]
  %v278 = vld [vmem:[%s2 + $0xc] sm:$0xf]
  %v279 = vld [vmem:[%s2 + $0x10] sm:$0xf]
  %v280 = vld [vmem:[%s2 + $0x14] sm:$0xf]
  %v281 = vld [vmem:[%s2 + $0x18] sm:$0xf]
  %v282 = vld [vmem:[%s2 + $0x1c] sm:$0xf]
  %v283 = vld [vmem:[%s2 + $0x20] sm:$0xf]
  %v284 = vld [vmem:[%s2 + $0x24] sm:$0xf]
  %v285 = vld [vmem:[%s2 + $0x28] sm:$0xf]
  %v286 = vld [vmem:[%s2 + $0x2c] sm:$0xf]
  %v287 = vld [vmem:[%s2 + $0x30] sm:$0xf]
  %v288 = vld [vmem:[%s2 + $0x34] sm:$0xf]
  %v289 = vld [vmem:[%s2 + $0x38] sm:$0xf]
  %v290 = vld [vmem:[%s2 + $0x3c] sm:$0xf]
  %v291 = vld [vmem:[%s3] sm:$0xf]
  %v292 = vld [vmem:[%s3 + $0x4] sm:$0xf]
  %v293 = vld [vmem:[%s3 + $0x8] sm:$0xf]
  %v294 = vld [vmem:[%s3 + $0xc] sm:$0xf]
  %v295 = vld [vmem:[%s3 + $0x10] sm:$0xf]
  %v296 = vld [vmem:[%s3 + $0x14] sm:$0xf]
  %v297 = vld [vmem:[%s3 + $0x18] sm:$0xf]
  %v298 = vld [vmem:[%s3 + $0x1c] sm:$0xf]
  %v299 = vld [vmem:[%s3 + $0x20] sm:$0xf]
  %v300 = vld [vmem:[%s3 + $0x24] sm:$0xf]
  %v301 = vld [vmem:[%s3 + $0x28] sm:$0xf]
  %v302 = vld [vmem:[%s3 + $0x2c] sm:$0xf]
  %v303 = vld [vmem:[%s3 + $0x30] sm:$0xf]
  %v304 = vld [vmem:[%s3 + $0x34] sm:$0xf]
  %v305 = vld [vmem:[%s3 + $0x38] sm:$0xf]
  %v306 = vld [vmem:[%s3 + $0x3c] sm:$0xf]
  %v323 = vunpack.c.l.b16 %v251
  %v324 = vunpack.c.l.b16 %v252
  %v325 = vunpack.c.l.b16 %v253
  %v326 = vunpack.c.l.b16 %v254
  %v327 = vunpack.c.l.b16 %v255
  %v328 = vunpack.c.l.b16 %v256
  %v329 = vunpack.c.l.b16 %v257
  %v330 = vunpack.c.l.b16 %v258
  %v331 = vunpack.c.l.b16 %v259
  %v332 = vunpack.c.l.b16 %v260
  %v333 = vunpack.c.l.b16 %v261
  %v334 = vunpack.c.l.b16 %v262
  %v335 = vunpack.c.l.b16 %v263
  %v336 = vunpack.c.l.b16 %v264
  %v337 = vunpack.c.l.b16 %v265
  %v338 = vunpack.c.l.b16 %v266
  %v339 = vpack.c.b16 %v324, %v323
  %v340 = vpack.c.b16 %v326, %v325
  %v341 = vpack.c.b16 %v328, %v327
  %v342 = vpack.c.b16 %v330, %v329
  %v343 = vpack.c.b16 %v332, %v331
  %v344 = vpack.c.b16 %v334, %v333
  %v345 = vpack.c.b16 %v336, %v335
  %v346 = vpack.c.b16 %v338, %v337
  %v371 = vunpack.c.l.b16 %v291
  %v372 = vunpack.c.l.b16 %v292
  %v373 = vunpack.c.l.b16 %v293
  %v374 = vunpack.c.l.b16 %v294
  %v375 = vunpack.c.l.b16 %v295
  %v376 = vunpack.c.l.b16 %v296
  %v377 = vunpack.c.l.b16 %v297
  %v378 = vunpack.c.l.b16 %v298
  %v379 = vunpack.c.l.b16 %v299
  %v380 = vunpack.c.l.b16 %v300
  %v381 = vunpack.c.l.b16 %v301
  %v382 = vunpack.c.l.b16 %v302
  %v383 = vunpack.c.l.b16 %v303
  %v384 = vunpack.c.l.b16 %v304
  %v385 = vunpack.c.l.b16 %v305
  %v386 = vunpack.c.l.b16 %v306
  %v387 = vpack.c.b16 %v372, %v371
  %v388 = vpack.c.b16 %v374, %v373
  %v389 = vpack.c.b16 %v376, %v375
  %v390 = vpack.c.b16 %v378, %v377
  %v391 = vpack.c.b16 %v380, %v379
  %v392 = vpack.c.b16 %v382, %v381
  %v393 = vpack.c.b16 %v384, %v383
  %v394 = vpack.c.b16 %v386, %v385
  %403 = vmatprep.subr.bf16.mxu0 0
  %404 = vmatpush1.bf16.msra.mxu0 %v387
  %405 = vmatprep.subr.bf16.mxu0 0
  %406 = vmatpush1.bf16.msra.mxu0 %v388
  %407 = vmatprep.subr.bf16.mxu0 0
  %408 = vmatpush1.bf16.msra.mxu0 %v389
  %409 = vmatprep.subr.bf16.mxu0 0
  %410 = vmatpush1.bf16.msra.mxu0 %v390
  %411 = vmatprep.subr.bf16.mxu0 0
  %412 = vmatpush1.bf16.msra.mxu0 %v391
  %413 = vmatprep.subr.bf16.mxu0 0
  %414 = vmatpush1.bf16.msra.mxu0 %v392
  %415 = vmatprep.subr.bf16.mxu0 0
  %416 = vmatpush1.bf16.msra.mxu0 %v393
  %417 = vmatprep.subr.bf16.mxu0 0
  %418 = vmatpush1.bf16.msra.mxu0 %v394
  %419 = vmatprep.subr.bf16.mxu0 0
  %420 = vmatpush1.bf16.msra.mxu0 0
  %421 = vmatprep.subr.bf16.mxu0 0
  %422 = vmatpush1.bf16.msra.mxu0 0
  %423 = vmatprep.subr.bf16.mxu0 0
  %424 = vmatpush1.bf16.msra.mxu0 0
  %425 = vmatprep.subr.bf16.mxu0 0
  %426 = vmatpush1.bf16.msra.mxu0 0
  %427 = vmatprep.subr.bf16.mxu0 0
  %428 = vmatpush1.bf16.msra.mxu0 0
  %429 = vmatprep.subr.bf16.mxu0 0
  %430 = vmatpush1.bf16.msra.mxu0 0
  %431 = vmatprep.subr.bf16.mxu0 0
  %432 = vmatpush1.bf16.msra.mxu0 0
  %433 = vmatprep.subr.bf16.mxu0 0
  %434 = vmatpush1.bf16.msra.mxu0 0
  %435 = vmatprep.mubr.bf16.mxu0 0
  %436 = vmatmul.mubr.bf16.gmra.mrb[0].mxu0 %v339
  %v437 = vpop.f32.mrb[0].mxu0
  %v438 = vadd.f32 0.0, %v437
  %v439 = vpop.f32.mrb[0].mxu0
  %v440 = vpop.f32.mrb[0].mxu0
  %v441 = vadd.f32 0.0, %v440
  %v442 = vpop.f32.mrb[0].mxu0
  %443 = vmatprep.mubr.bf16.mxu0 0
  %444 = vmatmul.mubr.bf16.gmra.mrb[0].mxu0 %v340
  %v445 = vpop.f32.mrb[0].mxu0
  %v446 = vadd.f32 0.0, %v445
  %v447 = vpop.f32.mrb[0].mxu0
  %v448 = vpop.f32.mrb[0].mxu0
  %v449 = vadd.f32 0.0, %v448
  %v450 = vpop.f32.mrb[0].mxu0
  %451 = vmatprep.mubr.bf16.mxu0 0
  %452 = vmatmul.mubr.bf16.gmra.mrb[0].mxu0 %v341
  %v453 = vpop.f32.mrb[0].mxu0
  %v454 = vadd.f32 0.0, %v453
  %v455 = vpop.f32.mrb[0].mxu0
  %v456 = vpop.f32.mrb[0].mxu0
  %v457 = vadd.f32 0.0, %v456
  %v458 = vpop.f32.mrb[0].mxu0
  %459 = vmatprep.mubr.bf16.mxu0 0
  %460 = vmatmul.mubr.bf16.gmra.mrb[0].mxu0 %v342
  %v461 = vpop.f32.mrb[0].mxu0
  %v462 = vadd.f32 0.0, %v461
  %v463 = vpop.f32.mrb[0].mxu0
  %v464 = vpop.f32.mrb[0].mxu0
  %v465 = vadd.f32 0.0, %v464
  %v466 = vpop.f32.mrb[0].mxu0
  %467 = vmatprep.mubr.bf16.mxu0 0
  %468 = vmatmul.mubr.bf16.gmra.mrb[0].mxu0 %v343
  %v469 = vpop.f32.mrb[0].mxu0
  %v470 = vadd.f32 0.0, %v469
  %v471 = vpop.f32.mrb[0].mxu0
  %v472 = vpop.f32.mrb[0].mxu0
  %v473 = vadd.f32 0.0, %v472
  %v474 = vpop.f32.mrb[0].mxu0
  %475 = vmatprep.mubr.bf16.mxu0 0
  %476 = vmatmul.mubr.bf16.gmra.mrb[0].mxu0 %v344
  %v477 = vpop.f32.mrb[0].mxu0
  %v478 = vadd.f32 0.0, %v477
  %v479 = vpop.f32.mrb[0].mxu0
  %v480 = vpop.f32.mrb[0].mxu0
  %v481 = vadd.f32 0.0, %v480
  %v482 = vpop.f32.mrb[0].mxu0
  %483 = vmatprep.mubr.bf16.mxu0 0
  %484 = vmatmul.mubr.bf16.gmra.mrb[0].mxu0 %v345
  %v485 = vpop.f32.mrb[0].mxu0
  %v486 = vadd.f32 0.0, %v485
  %v487 = vpop.f32.mrb[0].mxu0
  %v488 = vpop.f32.mrb[0].mxu0
  %v489 = vadd.f32 0.0, %v488
  %v490 = vpop.f32.mrb[0].mxu0
  %491 = vmatprep.mubr.bf16.mxu0 0
  %492 = vmatmul.mubr.bf16.gmra.mrb[0].mxu0 %v346
  %v493 = vpop.f32.mrb[0].mxu0
  %v494 = vadd.f32 0.0, %v493
  %v495 = vpop.f32.mrb[0].mxu0
  %v496 = vpop.f32.mrb[0].mxu0
  %v497 = vadd.f32 0.0, %v496
  %v498 = vpop.f32.mrb[0].mxu0
  %499 = vdwg.mxu0
  %v516 = vunpack.c.l.b16 %v275
  %v517 = vunpack.c.l.b16 %v276
  %v518 = vunpack.c.l.b16 %v277
  %v519 = vunpack.c.l.b16 %v278
  %v520 = vunpack.c.l.b16 %v279
  %v521 = vunpack.c.l.b16 %v280
  %v522 = vunpack.c.l.b16 %v281
  %v523 = vunpack.c.l.b16 %v282
  %v524 = vunpack.c.l.b16 %v283
  %v525 = vunpack.c.l.b16 %v284
  %v526 = vunpack.c.l.b16 %v285
  %v527 = vunpack.c.l.b16 %v286
  %v528 = vunpack.c.l.b16 %v287
  %v529 = vunpack.c.l.b16 %v288
  %v530 = vunpack.c.l.b16 %v289
  %v531 = vunpack.c.l.b16 %v290
  %v532 = vpack.c.b16 %v517, %v516
  %v533 = vpack.c.b16 %v519, %v518
  %v534 = vpack.c.b16 %v521, %v520
  %v535 = vpack.c.b16 %v523, %v522
  %v536 = vpack.c.b16 %v525, %v524
  %v537 = vpack.c.b16 %v527, %v526
  %v538 = vpack.c.b16 %v529, %v528
  %v539 = vpack.c.b16 %v531, %v530
  %548 = vmatprep.subr.bf16.mxu0 0
  %549 = vmatpush1.bf16.msra.mxu0 %v532
  %550 = vmatprep.subr.bf16.mxu0 0
  %551 = vmatpush1.bf16.msra.mxu0 %v533
  %552 = vmatprep.subr.bf16.mxu0 0
  %553 = vmatpush1.bf16.msra.mxu0 %v534
  %554 = vmatprep.subr.bf16.mxu0 0
  %555 = vmatpush1.bf16.msra.mxu0 %v535
  %556 = vmatprep.subr.bf16.mxu0 0
  %557 = vmatpush1.bf16.msra.mxu0 %v536
  %558 = vmatprep.subr.bf16.mxu0 0
  %559 = vmatpush1.bf16.msra.mxu0 %v537
  %560 = vmatprep.subr.bf16.mxu0 0
  %561 = vmatpush1.bf16.msra.mxu0 %v538
  %562 = vmatprep.subr.bf16.mxu0 0
  %563 = vmatpush1.bf16.msra.mxu0 %v539
  %564 = vmatprep.subr.bf16.mxu0 0
  %565 = vmatpush1.bf16.msra.mxu0 0
  %566 = vmatprep.subr.bf16.mxu0 0
  %567 = vmatpush1.bf16.msra.mxu0 0
  %568 = vmatprep.subr.bf16.mxu0 0
  %569 = vmatpush1.bf16.msra.mxu0 0
  %570 = vmatprep.subr.bf16.mxu0 0
  %571 = vmatpush1.bf16.msra.mxu0 0
  %572 = vmatprep.subr.bf16.mxu0 0
  %573 = vmatpush1.bf16.msra.mxu0 0
  %574 = vmatprep.subr.bf16.mxu0 0
  %575 = vmatpush1.bf16.msra.mxu0 0
  %576 = vmatprep.subr.bf16.mxu0 0
  %577 = vmatpush1.bf16.msra.mxu0 0
  %578 = vmatprep.subr.bf16.mxu0 0
  %579 = vmatpush1.bf16.msra.mxu0 0
  %580 = vmatprep.mubr.bf16.mxu0 0
  %581 = vmatmul.mubr.bf16.gmra.mrb[0].mxu0 %v267
  %v582 = vpop.f32.mrb[0].mxu0
  %v583 = vadd.f32 %v438, %v582
  %v584 = vpop.f32.mrb[0].mxu0
  %v585 = vpop.f32.mrb[0].mxu0
  %v586 = vadd.f32 %v441, %v585
  %v587 = vpop.f32.mrb[0].mxu0
  %588 = vmatprep.mubr.bf16.mxu0 0
  %589 = vmatmul.mubr.bf16.gmra.mrb[0].mxu0 %v268
  %v590 = vpop.f32.mrb[0].mxu0
  %v591 = vadd.f32 %v446, %v590
  %v592 = vpop.f32.mrb[0].mxu0
  %v593 = vpop.f32.mrb[0].mxu0
  %v594 = vadd.f32 %v449, %v593
  %v595 = vpop.f32.mrb[0].mxu0
  %596 = vmatprep.mubr.bf16.mxu0 0
  %597 = vmatmul.mubr.bf16.gmra.mrb[0].mxu0 %v269
  %v598 = vpop.f32.mrb[0].mxu0
  %v599 = vadd.f32 %v454, %v598
  %v600 = vpop.f32.mrb[0].mxu0
  %v601 = vpop.f32.mrb[0].mxu0
  %v602 = vadd.f32 %v457, %v601
  %v603 = vpop.f32.mrb[0].mxu0
  %604 = vmatprep.mubr.bf16.mxu0 0
  %605 = vmatmul.mubr.bf16.gmra.mrb[0].mxu0 %v270
  %v606 = vpop.f32.mrb[0].mxu0
  %v607 = vadd.f32 %v462, %v606
  %v608 = vpop.f32.mrb[0].mxu0
  %v609 = vpop.f32.mrb[0].mxu0
  %v610 = vadd.f32 %v465, %v609
  %v611 = vpop.f32.mrb[0].mxu0
  %612 = vmatprep.mubr.bf16.mxu0 0
  %613 = vmatmul.mubr.bf16.gmra.mrb[0].mxu0 %v271
  %v614 = vpop.f32.mrb[0].mxu0
  %v615 = vadd.f32 %v470, %v614
  %v616 = vpop.f32.mrb[0].mxu0
  %v617 = vpop.f32.mrb[0].mxu0
  %v618 = vadd.f32 %v473, %v617
  %v619 = vpop.f32.mrb[0].mxu0
  %620 = vmatprep.mubr.bf16.mxu0 0
  %621 = vmatmul.mubr.bf16.gmra.mrb[0].mxu0 %v272
  %v622 = vpop.f32.mrb[0].mxu0
  %v623 = vadd.f32 %v478, %v622
  %v624 = vpop.f32.mrb[0].mxu0
  %v625 = vpop.f32.mrb[0].mxu0
  %v626 = vadd.f32 %v481, %v625
  %v627 = vpop.f32.mrb[0].mxu0
  %628 = vmatprep.mubr.bf16.mxu0 0
  %629 = vmatmul.mubr.bf16.gmra.mrb[0].mxu0 %v273
  %v630 = vpop.f32.mrb[0].mxu0
  %v631 = vadd.f32 %v486, %v630
  %v632 = vpop.f32.mrb[0].mxu0
  %v633 = vpop.f32.mrb[0].mxu0
  %v634 = vadd.f32 %v489, %v633
  %v635 = vpop.f32.mrb[0].mxu0
  %636 = vmatprep.mubr.bf16.mxu0 0
  %637 = vmatmul.mubr.bf16.gmra.mrb[0].mxu0 %v274
  %v638 = vpop.f32.mrb[0].mxu0
  %v639 = vadd.f32 %v494, %v638
  %v640 = vpop.f32.mrb[0].mxu0
  %v641 = vpop.f32.mrb[0].mxu0
  %v642 = vadd.f32 %v497, %v641
  %v643 = vpop.f32.mrb[0].mxu0
  %644 = vdwg.mxu0
  %v645 = vld [vmem:[%s4] sm:$0x1]
  %v647 = vlaneseq
  %v648 = vshrl.u32 %v647, 7
  %v649 = vsub.s32 0, %v648
  %v650 = vrot.slane %v645, %v649
  %v652 = vadd.f32 %v583, %v650
  %v653 = vadd.f32 %v586, %v650
  %v654 = vadd.f32 %v591, %v650
  %v655 = vadd.f32 %v594, %v650
  %v656 = vadd.f32 %v599, %v650
  %v657 = vadd.f32 %v602, %v650
  %v658 = vadd.f32 %v607, %v650
  %v659 = vadd.f32 %v610, %v650
  %v660 = vadd.f32 %v615, %v650
  %v661 = vadd.f32 %v618, %v650
  %v662 = vadd.f32 %v623, %v650
  %v663 = vadd.f32 %v626, %v650
  %v664 = vadd.f32 %v631, %v650
  %v665 = vadd.f32 %v634, %v650
  %v666 = vadd.f32 %v639, %v650
  %v667 = vadd.f32 %v642, %v650
  %668 = vst [vmem:[%s5] sm:$0xff] %v652
  %669 = vst [vmem:[%s5 + $0x8] sm:$0xff] %v653
  %670 = vst [vmem:[%s5 + $0x10] sm:$0xff] %v654
  %671 = vst [vmem:[%s5 + $0x18] sm:$0xff] %v655
  %672 = vst [vmem:[%s5 + $0x20] sm:$0xff] %v656
  %673 = vst [vmem:[%s5 + $0x28] sm:$0xff] %v657
  %674 = vst [vmem:[%s5 + $0x30] sm:$0xff] %v658
  %675 = vst [vmem:[%s5 + $0x38] sm:$0xff] %v659
  %676 = vst [vmem:[%s5 + $0x40] sm:$0xff] %v660
  %677 = vst [vmem:[%s5 + $0x48] sm:$0xff] %v661
  %678 = vst [vmem:[%s5 + $0x50] sm:$0xff] %v662
  %679 = vst [vmem:[%s5 + $0x58] sm:$0xff] %v663
  %680 = vst [vmem:[%s5 + $0x60] sm:$0xff] %v664
  %681 = vst [vmem:[%s5 + $0x68] sm:$0xff] %v665
  %682 = vst [vmem:[%s5 + $0x70] sm:$0xff] %v666
  %683 = vst [vmem:[%s5 + $0x78] sm:$0xff] %v667
  // Predicated region
  $region22: #{graphsage_forward.3} parent=0 // pred_check
    _
  $region23: #{graphsage_forward.3} parent=0 // pred_check_branch
    %685 = sbr.rel (0) target = $region25
  $region24: #{graphsage_forward.3} parent=0 // pred_region
    _
  $region25: #{graphsage_forward.3} parent=0 // pred_fallthru
    _
  // Predicated region
  $region26: #{graphsage_forward.3} parent=0 // pred_check
    _
  $region27: #{graphsage_forward.3} parent=0 // pred_check_branch
    %687 = sbr.rel (0) target = $region29
  $region28: #{graphsage_forward.3} parent=0 // pred_region
    _
  $region29: #{graphsage_forward.3} parent=0 // pred_fallthru
    _

// kernel: graphsage_forward.2
$region0: #{graphsage_forward.2}
  #allocation0 [shape = 'u32[]', space=smem, size = 0x4, offset = 0x4, fixed_abs, tag = 'smem constant byte address 0x4 - core index']
  #allocation1 [shape = 'u32[144,128]{1,0:T(1,128)}', space=vmem, size = 0x12000, scoped, tag = 'internal scratch']
  %s0 = inlined_call_operand.vmem [shape: bf16[128,128], index: 0, kind: input, shape index: {}]
  %s1 = inlined_call_operand.vmem [shape: bf16[128,128], index: 1, kind: input, shape index: {}]
  %s2 = inlined_call_operand.vmem [shape: bf16[128,128], index: 2, kind: input, shape index: {}]
  %s3 = inlined_call_operand.vmem [shape: bf16[128,128], index: 3, kind: input, shape index: {}]
  %s4 = inlined_call_operand.vmem [shape: f32[1,128], index: 4, kind: input, shape index: {}]
  %s5 = inlined_call_operand.vmem [shape: bf16[128,128], index: 5, kind: output, shape index: {}]
  %s6 = sld [smem:[#allocation0]]
  $region30: #{graphsage_forward.2} parent=0
    _
  %s8 = ssub.s32 1, %s6
  %s9 = scalar_select 0, %s8, %s6
  // Predicated region
  $region2: #{graphsage_forward.2} parent=0 // pred_check
    _
  $region3: #{graphsage_forward.2} parent=0 // pred_check_branch
    %11 = sbr.rel (0) target = $region5
  $region4: #{graphsage_forward.2} parent=0 // pred_region
    _
  $region5: #{graphsage_forward.2} parent=0 // pred_fallthru
    _
  // Predicated region
  $region6: #{graphsage_forward.2} parent=0 // pred_check
    _
  $region7: #{graphsage_forward.2} parent=0 // pred_check_branch
    %13 = sbr.rel (0) target = $region9
  $region8: #{graphsage_forward.2} parent=0 // pred_region
    _
  $region9: #{graphsage_forward.2} parent=0 // pred_fallthru
    _
  // Predicated region
  $region10: #{graphsage_forward.2} parent=0 // pred_check
    _
  $region11: #{graphsage_forward.2} parent=0 // pred_check_branch
    %15 = sbr.rel (0) target = $region13
  $region12: #{graphsage_forward.2} parent=0 // pred_region
    _
  $region13: #{graphsage_forward.2} parent=0 // pred_fallthru
    _
  // Predicated region
  $region14: #{graphsage_forward.2} parent=0 // pred_check
    _
  $region15: #{graphsage_forward.2} parent=0 // pred_check_branch
    %17 = sbr.rel (0) target = $region17
  $region16: #{graphsage_forward.2} parent=0 // pred_region
    _
  $region17: #{graphsage_forward.2} parent=0 // pred_fallthru
    _
  // Predicated region
  $region18: #{graphsage_forward.2} parent=0 // pred_check
    _
  $region19: #{graphsage_forward.2} parent=0 // pred_check_branch
    %19 = sbr.rel (0) target = $region21
  $region20: #{graphsage_forward.2} parent=0 // pred_region
    _
  $region21: #{graphsage_forward.2} parent=0 // pred_fallthru
    _
  %v21 = vld [vmem:[%s0] sm:$0xf]
  %v22 = vld [vmem:[%s0 + $0x4] sm:$0xf]
  %v23 = vld [vmem:[%s0 + $0x8] sm:$0xf]
  %v24 = vld [vmem:[%s0 + $0xc] sm:$0xf]
  %v25 = vld [vmem:[%s0 + $0x10] sm:$0xf]
  %v26 = vld [vmem:[%s0 + $0x14] sm:$0xf]
  %v27 = vld [vmem:[%s0 + $0x18] sm:$0xf]
  %v28 = vld [vmem:[%s0 + $0x1c] sm:$0xf]
  %v29 = vld [vmem:[%s0 + $0x20] sm:$0xf]
  %v30 = vld [vmem:[%s0 + $0x24] sm:$0xf]
  %v31 = vld [vmem:[%s0 + $0x28] sm:$0xf]
  %v32 = vld [vmem:[%s0 + $0x2c] sm:$0xf]
  %v33 = vld [vmem:[%s0 + $0x30] sm:$0xf]
  %v34 = vld [vmem:[%s0 + $0x34] sm:$0xf]
  %v35 = vld [vmem:[%s0 + $0x38] sm:$0xf]
  %v36 = vld [vmem:[%s0 + $0x3c] sm:$0xf]
  %v37 = vld [vmem:[%s1] sm:$0xf]
  %v38 = vld [vmem:[%s1 + $0x4] sm:$0xf]
  %v39 = vld [vmem:[%s1 + $0x8] sm:$0xf]
  %v40 = vld [vmem:[%s1 + $0xc] sm:$0xf]
  %v41 = vld [vmem:[%s1 + $0x10] sm:$0xf]
  %v42 = vld [vmem:[%s1 + $0x14] sm:$0xf]
  %v43 = vld [vmem:[%s1 + $0x18] sm:$0xf]
  %v44 = vld [vmem:[%s1 + $0x1c] sm:$0xf]
  %v45 = vld [vmem:[%s1 + $0x20] sm:$0xf]
  %v46 = vld [vmem:[%s1 + $0x24] sm:$0xf]
  %v47 = vld [vmem:[%s1 + $0x28] sm:$0xf]
  %v48 = vld [vmem:[%s1 + $0x2c] sm:$0xf]
  %v49 = vld [vmem:[%s1 + $0x30] sm:$0xf]
  %v50 = vld [vmem:[%s1 + $0x34] sm:$0xf]
  %v51 = vld [vmem:[%s1 + $0x38] sm:$0xf]
  %v52 = vld [vmem:[%s1 + $0x3c] sm:$0xf]
  %v69 = vunpack.c.l.b16 %v21
  %v70 = vunpack.c.l.b16 %v22
  %v71 = vunpack.c.l.b16 %v23
  %v72 = vunpack.c.l.b16 %v24
  %v73 = vunpack.c.l.b16 %v25
  %v74 = vunpack.c.l.b16 %v26
  %v75 = vunpack.c.l.b16 %v27
  %v76 = vunpack.c.l.b16 %v28
  %v77 = vunpack.c.l.b16 %v29
  %v78 = vunpack.c.l.b16 %v30
  %v79 = vunpack.c.l.b16 %v31
  %v80 = vunpack.c.l.b16 %v32
  %v81 = vunpack.c.l.b16 %v33
  %v82 = vunpack.c.l.b16 %v34
  %v83 = vunpack.c.l.b16 %v35
  %v84 = vunpack.c.l.b16 %v36
  %v85 = vpack.c.b16 %v70, %v69
  %v86 = vpack.c.b16 %v72, %v71
  %v87 = vpack.c.b16 %v74, %v73
  %v88 = vpack.c.b16 %v76, %v75
  %v89 = vpack.c.b16 %v78, %v77
  %v90 = vpack.c.b16 %v80, %v79
  %v91 = vpack.c.b16 %v82, %v81
  %v92 = vpack.c.b16 %v84, %v83
  %v117 = vunpack.c.l.b16 %v37
  %v118 = vunpack.c.l.b16 %v38
  %v119 = vunpack.c.l.b16 %v39
  %v120 = vunpack.c.l.b16 %v40
  %v121 = vunpack.c.l.b16 %v41
  %v122 = vunpack.c.l.b16 %v42
  %v123 = vunpack.c.l.b16 %v43
  %v124 = vunpack.c.l.b16 %v44
  %v125 = vunpack.c.l.b16 %v45
  %v126 = vunpack.c.l.b16 %v46
  %v127 = vunpack.c.l.b16 %v47
  %v128 = vunpack.c.l.b16 %v48
  %v129 = vunpack.c.l.b16 %v49
  %v130 = vunpack.c.l.b16 %v50
  %v131 = vunpack.c.l.b16 %v51
  %v132 = vunpack.c.l.b16 %v52
  %v133 = vpack.c.b16 %v118, %v117
  %v134 = vpack.c.b16 %v120, %v119
  %v135 = vpack.c.b16 %v122, %v121
  %v136 = vpack.c.b16 %v124, %v123
  %v137 = vpack.c.b16 %v126, %v125
  %v138 = vpack.c.b16 %v128, %v127
  %v139 = vpack.c.b16 %v130, %v129
  %v140 = vpack.c.b16 %v132, %v131
  %149 = vmatprep.subr.bf16.mxu0 0
  %150 = vmatpush1.bf16.msra.mxu0 %v133
  %151 = vmatprep.subr.bf16.mxu0 0
  %152 = vmatpush1.bf16.msra.mxu0 %v134
  %153 = vmatprep.subr.bf16.mxu0 0
  %154 = vmatpush1.bf16.msra.mxu0 %v135
  %155 = vmatprep.subr.bf16.mxu0 0
  %156 = vmatpush1.bf16.msra.mxu0 %v136
  %157 = vmatprep.subr.bf16.mxu0 0
  %158 = vmatpush1.bf16.msra.mxu0 %v137
  %159 = vmatprep.subr.bf16.mxu0 0
  %160 = vmatpush1.bf16.msra.mxu0 %v138
  %161 = vmatprep.subr.bf16.mxu0 0
  %162 = vmatpush1.bf16.msra.mxu0 %v139
  %163 = vmatprep.subr.bf16.mxu0 0
  %164 = vmatpush1.bf16.msra.mxu0 %v140
  %165 = vmatprep.subr.bf16.mxu0 0
  %166 = vmatpush1.bf16.msra.mxu0 0
  %167 = vmatprep.subr.bf16.mxu0 0
  %168 = vmatpush1.bf16.msra.mxu0 0
  %169 = vmatprep.subr.bf16.mxu0 0
  %170 = vmatpush1.bf16.msra.mxu0 0
  %171 = vmatprep.subr.bf16.mxu0 0
  %172 = vmatpush1.bf16.msra.mxu0 0
  %173 = vmatprep.subr.bf16.mxu0 0
  %174 = vmatpush1.bf16.msra.mxu0 0
  %175 = vmatprep.subr.bf16.mxu0 0
  %176 = vmatpush1.bf16.msra.mxu0 0
  %177 = vmatprep.subr.bf16.mxu0 0
  %178 = vmatpush1.bf16.msra.mxu0 0
  %179 = vmatprep.subr.bf16.mxu0 0
  %180 = vmatpush1.bf16.msra.mxu0 0
  %181 = vmatprep.mubr.bf16.mxu0 0
  %182 = vmatmul.mubr.bf16.gmra.mrb[0].mxu0 %v85
  %v183 = vpop.f32.mrb[0].mxu0
  %v184 = vadd.f32 0.0, %v183
  %v185 = vpop.f32.mrb[0].mxu0
  %v186 = vpop.f32.mrb[0].mxu0
  %v187 = vadd.f32 0.0, %v186
  %v188 = vpop.f32.mrb[0].mxu0
  %189 = vmatprep.mubr.bf16.mxu0 0
  %190 = vmatmul.mubr.bf16.gmra.mrb[0].mxu0 %v86
  %v191 = vpop.f32.mrb[0].mxu0
  %v192 = vadd.f32 0.0, %v191
  %v193 = vpop.f32.mrb[0].mxu0
  %v194 = vpop.f32.mrb[0].mxu0
  %v195 = vadd.f32 0.0, %v194
  %v196 = vpop.f32.mrb[0].mxu0
  %197 = vmatprep.mubr.bf16.mxu0 0
  %198 = vmatmul.mubr.bf16.gmra.mrb[0].mxu0 %v87
  %v199 = vpop.f32.mrb[0].mxu0
  %v200 = vadd.f32 0.0, %v199
  %v201 = vpop.f32.mrb[0].mxu0
  %v202 = vpop.f32.mrb[0].mxu0
  %v203 = vadd.f32 0.0, %v202
  %v204 = vpop.f32.mrb[0].mxu0
  %205 = vmatprep.mubr.bf16.mxu0 0
  %206 = vmatmul.mubr.bf16.gmra.mrb[0].mxu0 %v88
  %v207 = vpop.f32.mrb[0].mxu0
  %v208 = vadd.f32 0.0, %v207
  %v209 = vpop.f32.mrb[0].mxu0
  %v210 = vpop.f32.mrb[0].mxu0
  %v211 = vadd.f32 0.0, %v210
  %v212 = vpop.f32.mrb[0].mxu0
  %213 = vmatprep.mubr.bf16.mxu0 0
  %214 = vmatmul.mubr.bf16.gmra.mrb[0].mxu0 %v89
  %v215 = vpop.f32.mrb[0].mxu0
  %v216 = vadd.f32 0.0, %v215
  %v217 = vpop.f32.mrb[0].mxu0
  %v218 = vpop.f32.mrb[0].mxu0
  %v219 = vadd.f32 0.0, %v218
  %v220 = vpop.f32.mrb[0].mxu0
  %221 = vmatprep.mubr.bf16.mxu0 0
  %222 = vmatmul.mubr.bf16.gmra.mrb[0].mxu0 %v90
  %v223 = vpop.f32.mrb[0].mxu0
  %v224 = vadd.f32 0.0, %v223
  %v225 = vpop.f32.mrb[0].mxu0
  %v226 = vpop.f32.mrb[0].mxu0
  %v227 = vadd.f32 0.0, %v226
  %v228 = vpop.f32.mrb[0].mxu0
  %229 = vmatprep.mubr.bf16.mxu0 0
  %230 = vmatmul.mubr.bf16.gmra.mrb[0].mxu0 %v91
  %v231 = vpop.f32.mrb[0].mxu0
  %v232 = vadd.f32 0.0, %v231
  %v233 = vpop.f32.mrb[0].mxu0
  %v234 = vpop.f32.mrb[0].mxu0
  %v235 = vadd.f32 0.0, %v234
  %v236 = vpop.f32.mrb[0].mxu0
  %237 = vmatprep.mubr.bf16.mxu0 0
  %238 = vmatmul.mubr.bf16.gmra.mrb[0].mxu0 %v92
  %v239 = vpop.f32.mrb[0].mxu0
  %v240 = vadd.f32 0.0, %v239
  %v241 = vpop.f32.mrb[0].mxu0
  %v242 = vpop.f32.mrb[0].mxu0
  %v243 = vadd.f32 0.0, %v242
  %v244 = vpop.f32.mrb[0].mxu0
  %245 = vdwg.mxu0
  %s246 = smul.u32 0, 128
  %s247 = sshra.s32 %s246, 3
  %s248 = sand.u32 %s246, 7
  %s249 = smul.addr %s247, 4
  %s250 = scalar_lea.vmem %s1, %s249
  %v251 = vld [vmem:[%s250] sm:$0xf]
  %v252 = vld [vmem:[%s250 + $0x4] sm:$0xf]
  %v253 = vld [vmem:[%s250 + $0x8] sm:$0xf]
  %v254 = vld [vmem:[%s250 + $0xc] sm:$0xf]
  %v255 = vld [vmem:[%s250 + $0x10] sm:$0xf]
  %v256 = vld [vmem:[%s250 + $0x14] sm:$0xf]
  %v257 = vld [vmem:[%s250 + $0x18] sm:$0xf]
  %v258 = vld [vmem:[%s250 + $0x1c] sm:$0xf]
  %v259 = vld [vmem:[%s250 + $0x20] sm:$0xf]
  %v260 = vld [vmem:[%s250 + $0x24] sm:$0xf]
  %v261 = vld [vmem:[%s250 + $0x28] sm:$0xf]
  %v262 = vld [vmem:[%s250 + $0x2c] sm:$0xf]
  %v263 = vld [vmem:[%s250 + $0x30] sm:$0xf]
  %v264 = vld [vmem:[%s250 + $0x34] sm:$0xf]
  %v265 = vld [vmem:[%s250 + $0x38] sm:$0xf]
  %v266 = vld [vmem:[%s250 + $0x3c] sm:$0xf]
  %v267 = vpack.c.bf16 %v187, %v184
  %v268 = vpack.c.bf16 %v195, %v192
  %v269 = vpack.c.bf16 %v203, %v200
  %v270 = vpack.c.bf16 %v211, %v208
  %v271 = vpack.c.bf16 %v219, %v216
  %v272 = vpack.c.bf16 %v227, %v224
  %v273 = vpack.c.bf16 %v235, %v232
  %v274 = vpack.c.bf16 %v243, %v240
  %v275 = vld [vmem:[%s2] sm:$0xf]
  %v276 = vld [vmem:[%s2 + $0x4] sm:$0xf]
  %v277 = vld [vmem:[%s2 + $0x8] sm:$0xf]
  %v278 = vld [vmem:[%s2 + $0xc] sm:$0xf]
  %v279 = vld [vmem:[%s2 + $0x10] sm:$0xf]
  %v280 = vld [vmem:[%s2 + $0x14] sm:$0xf]
  %v281 = vld [vmem:[%s2 + $0x18] sm:$0xf]
  %v282 = vld [vmem:[%s2 + $0x1c] sm:$0xf]
  %v283 = vld [vmem:[%s2 + $0x20] sm:$0xf]
  %v284 = vld [vmem:[%s2 + $0x24] sm:$0xf]
  %v285 = vld [vmem:[%s2 + $0x28] sm:$0xf]
  %v286 = vld [vmem:[%s2 + $0x2c] sm:$0xf]
  %v287 = vld [vmem:[%s2 + $0x30] sm:$0xf]
  %v288 = vld [vmem:[%s2 + $0x34] sm:$0xf]
  %v289 = vld [vmem:[%s2 + $0x38] sm:$0xf]
  %v290 = vld [vmem:[%s2 + $0x3c] sm:$0xf]
  %v291 = vld [vmem:[%s3] sm:$0xf]
  %v292 = vld [vmem:[%s3 + $0x4] sm:$0xf]
  %v293 = vld [vmem:[%s3 + $0x8] sm:$0xf]
  %v294 = vld [vmem:[%s3 + $0xc] sm:$0xf]
  %v295 = vld [vmem:[%s3 + $0x10] sm:$0xf]
  %v296 = vld [vmem:[%s3 + $0x14] sm:$0xf]
  %v297 = vld [vmem:[%s3 + $0x18] sm:$0xf]
  %v298 = vld [vmem:[%s3 + $0x1c] sm:$0xf]
  %v299 = vld [vmem:[%s3 + $0x20] sm:$0xf]
  %v300 = vld [vmem:[%s3 + $0x24] sm:$0xf]
  %v301 = vld [vmem:[%s3 + $0x28] sm:$0xf]
  %v302 = vld [vmem:[%s3 + $0x2c] sm:$0xf]
  %v303 = vld [vmem:[%s3 + $0x30] sm:$0xf]
  %v304 = vld [vmem:[%s3 + $0x34] sm:$0xf]
  %v305 = vld [vmem:[%s3 + $0x38] sm:$0xf]
  %v306 = vld [vmem:[%s3 + $0x3c] sm:$0xf]
  %v323 = vunpack.c.l.b16 %v251
  %v324 = vunpack.c.l.b16 %v252
  %v325 = vunpack.c.l.b16 %v253
  %v326 = vunpack.c.l.b16 %v254
  %v327 = vunpack.c.l.b16 %v255
  %v328 = vunpack.c.l.b16 %v256
  %v329 = vunpack.c.l.b16 %v257
  %v330 = vunpack.c.l.b16 %v258
  %v331 = vunpack.c.l.b16 %v259
  %v332 = vunpack.c.l.b16 %v260
  %v333 = vunpack.c.l.b16 %v261
  %v334 = vunpack.c.l.b16 %v262
  %v335 = vunpack.c.l.b16 %v263
  %v336 = vunpack.c.l.b16 %v264
  %v337 = vunpack.c.l.b16 %v265
  %v338 = vunpack.c.l.b16 %v266
  %v339 = vpack.c.b16 %v324, %v323
  %v340 = vpack.c.b16 %v326, %v325
  %v341 = vpack.c.b16 %v328, %v327
  %v342 = vpack.c.b16 %v330, %v329
  %v343 = vpack.c.b16 %v332, %v331
  %v344 = vpack.c.b16 %v334, %v333
  %v345 = vpack.c.b16 %v336, %v335
  %v346 = vpack.c.b16 %v338, %v337
  %v371 = vunpack.c.l.b16 %v291
  %v372 = vunpack.c.l.b16 %v292
  %v373 = vunpack.c.l.b16 %v293
  %v374 = vunpack.c.l.b16 %v294
  %v375 = vunpack.c.l.b16 %v295
  %v376 = vunpack.c.l.b16 %v296
  %v377 = vunpack.c.l.b16 %v297
  %v378 = vunpack.c.l.b16 %v298
  %v379 = vunpack.c.l.b16 %v299
  %v380 = vunpack.c.l.b16 %v300
  %v381 = vunpack.c.l.b16 %v301
  %v382 = vunpack.c.l.b16 %v302
  %v383 = vunpack.c.l.b16 %v303
  %v384 = vunpack.c.l.b16 %v304
  %v385 = vunpack.c.l.b16 %v305
  %v386 = vunpack.c.l.b16 %v306
  %v387 = vpack.c.b16 %v372, %v371
  %v388 = vpack.c.b16 %v374, %v373
  %v389 = vpack.c.b16 %v376, %v375
  %v390 = vpack.c.b16 %v378, %v377
  %v391 = vpack.c.b16 %v380, %v379
  %v392 = vpack.c.b16 %v382, %v381
  %v393 = vpack.c.b16 %v384, %v383
  %v394 = vpack.c.b16 %v386, %v385
  %403 = vmatprep.subr.bf16.mxu0 0
  %404 = vmatpush1.bf16.msra.mxu0 %v387
  %405 = vmatprep.subr.bf16.mxu0 0
  %406 = vmatpush1.bf16.msra.mxu0 %v388
  %407 = vmatprep.subr.bf16.mxu0 0
  %408 = vmatpush1.bf16.msra.mxu0 %v389
  %409 = vmatprep.subr.bf16.mxu0 0
  %410 = vmatpush1.bf16.msra.mxu0 %v390
  %411 = vmatprep.subr.bf16.mxu0 0
  %412 = vmatpush1.bf16.msra.mxu0 %v391
  %413 = vmatprep.subr.bf16.mxu0 0
  %414 = vmatpush1.bf16.msra.mxu0 %v392
  %415 = vmatprep.subr.bf16.mxu0 0
  %416 = vmatpush1.bf16.msra.mxu0 %v393
  %417 = vmatprep.subr.bf16.mxu0 0
  %418 = vmatpush1.bf16.msra.mxu0 %v394
  %419 = vmatprep.subr.bf16.mxu0 0
  %420 = vmatpush1.bf16.msra.mxu0 0
  %421 = vmatprep.subr.bf16.mxu0 0
  %422 = vmatpush1.bf16.msra.mxu0 0
  %423 = vmatprep.subr.bf16.mxu0 0
  %424 = vmatpush1.bf16.msra.mxu0 0
  %425 = vmatprep.subr.bf16.mxu0 0
  %426 = vmatpush1.bf16.msra.mxu0 0
  %427 = vmatprep.subr.bf16.mxu0 0
  %428 = vmatpush1.bf16.msra.mxu0 0
  %429 = vmatprep.subr.bf16.mxu0 0
  %430 = vmatpush1.bf16.msra.mxu0 0
  %431 = vmatprep.subr.bf16.mxu0 0
  %432 = vmatpush1.bf16.msra.mxu0 0
  %433 = vmatprep.subr.bf16.mxu0 0
  %434 = vmatpush1.bf16.msra.mxu0 0
  %435 = vmatprep.mubr.bf16.mxu0 0
  %436 = vmatmul.mubr.bf16.gmra.mrb[0].mxu0 %v339
  %v437 = vpop.f32.mrb[0].mxu0
  %v438 = vadd.f32 0.0, %v437
  %v439 = vpop.f32.mrb[0].mxu0
  %v440 = vpop.f32.mrb[0].mxu0
  %v441 = vadd.f32 0.0, %v440
  %v442 = vpop.f32.mrb[0].mxu0
  %443 = vmatprep.mubr.bf16.mxu0 0
  %444 = vmatmul.mubr.bf16.gmra.mrb[0].mxu0 %v340
  %v445 = vpop.f32.mrb[0].mxu0
  %v446 = vadd.f32 0.0, %v445
  %v447 = vpop.f32.mrb[0].mxu0
  %v448 = vpop.f32.mrb[0].mxu0
  %v449 = vadd.f32 0.0, %v448
  %v450 = vpop.f32.mrb[0].mxu0
  %451 = vmatprep.mubr.bf16.mxu0 0
  %452 = vmatmul.mubr.bf16.gmra.mrb[0].mxu0 %v341
  %v453 = vpop.f32.mrb[0].mxu0
  %v454 = vadd.f32 0.0, %v453
  %v455 = vpop.f32.mrb[0].mxu0
  %v456 = vpop.f32.mrb[0].mxu0
  %v457 = vadd.f32 0.0, %v456
  %v458 = vpop.f32.mrb[0].mxu0
  %459 = vmatprep.mubr.bf16.mxu0 0
  %460 = vmatmul.mubr.bf16.gmra.mrb[0].mxu0 %v342
  %v461 = vpop.f32.mrb[0].mxu0
  %v462 = vadd.f32 0.0, %v461
  %v463 = vpop.f32.mrb[0].mxu0
  %v464 = vpop.f32.mrb[0].mxu0
  %v465 = vadd.f32 0.0, %v464
  %v466 = vpop.f32.mrb[0].mxu0
  %467 = vmatprep.mubr.bf16.mxu0 0
  %468 = vmatmul.mubr.bf16.gmra.mrb[0].mxu0 %v343
  %v469 = vpop.f32.mrb[0].mxu0
  %v470 = vadd.f32 0.0, %v469
  %v471 = vpop.f32.mrb[0].mxu0
  %v472 = vpop.f32.mrb[0].mxu0
  %v473 = vadd.f32 0.0, %v472
  %v474 = vpop.f32.mrb[0].mxu0
  %475 = vmatprep.mubr.bf16.mxu0 0
  %476 = vmatmul.mubr.bf16.gmra.mrb[0].mxu0 %v344
  %v477 = vpop.f32.mrb[0].mxu0
  %v478 = vadd.f32 0.0, %v477
  %v479 = vpop.f32.mrb[0].mxu0
  %v480 = vpop.f32.mrb[0].mxu0
  %v481 = vadd.f32 0.0, %v480
  %v482 = vpop.f32.mrb[0].mxu0
  %483 = vmatprep.mubr.bf16.mxu0 0
  %484 = vmatmul.mubr.bf16.gmra.mrb[0].mxu0 %v345
  %v485 = vpop.f32.mrb[0].mxu0
  %v486 = vadd.f32 0.0, %v485
  %v487 = vpop.f32.mrb[0].mxu0
  %v488 = vpop.f32.mrb[0].mxu0
  %v489 = vadd.f32 0.0, %v488
  %v490 = vpop.f32.mrb[0].mxu0
  %491 = vmatprep.mubr.bf16.mxu0 0
  %492 = vmatmul.mubr.bf16.gmra.mrb[0].mxu0 %v346
  %v493 = vpop.f32.mrb[0].mxu0
  %v494 = vadd.f32 0.0, %v493
  %v495 = vpop.f32.mrb[0].mxu0
  %v496 = vpop.f32.mrb[0].mxu0
  %v497 = vadd.f32 0.0, %v496
  %v498 = vpop.f32.mrb[0].mxu0
  %499 = vdwg.mxu0
  %v516 = vunpack.c.l.b16 %v275
  %v517 = vunpack.c.l.b16 %v276
  %v518 = vunpack.c.l.b16 %v277
  %v519 = vunpack.c.l.b16 %v278
  %v520 = vunpack.c.l.b16 %v279
  %v521 = vunpack.c.l.b16 %v280
  %v522 = vunpack.c.l.b16 %v281
  %v523 = vunpack.c.l.b16 %v282
  %v524 = vunpack.c.l.b16 %v283
  %v525 = vunpack.c.l.b16 %v284
  %v526 = vunpack.c.l.b16 %v285
  %v527 = vunpack.c.l.b16 %v286
  %v528 = vunpack.c.l.b16 %v287
  %v529 = vunpack.c.l.b16 %v288
  %v530 = vunpack.c.l.b16 %v289
  %v531 = vunpack.c.l.b16 %v290
  %v532 = vpack.c.b16 %v517, %v516
  %v533 = vpack.c.b16 %v519, %v518
  %v534 = vpack.c.b16 %v521, %v520
  %v535 = vpack.c.b16 %v523, %v522
  %v536 = vpack.c.b16 %v525, %v524
  %v537 = vpack.c.b16 %v527, %v526
  %v538 = vpack.c.b16 %v529, %v528
  %v539 = vpack.c.b16 %v531, %v530
  %548 = vmatprep.subr.bf16.mxu0 0
  %549 = vmatpush1.bf16.msra.mxu0 %v532
  %550 = vmatprep.subr.bf16.mxu0 0
  %551 = vmatpush1.bf16.msra.mxu0 %v533
  %552 = vmatprep.subr.bf16.mxu0 0
  %553 = vmatpush1.bf16.msra.mxu0 %v534
  %554 = vmatprep.subr.bf16.mxu0 0
  %555 = vmatpush1.bf16.msra.mxu0 %v535
  %556 = vmatprep.subr.bf16.mxu0 0
  %557 = vmatpush1.bf16.msra.mxu0 %v536
  %558 = vmatprep.subr.bf16.mxu0 0
  %559 = vmatpush1.bf16.msra.mxu0 %v537
  %560 = vmatprep.subr.bf16.mxu0 0
  %561 = vmatpush1.bf16.msra.mxu0 %v538
  %562 = vmatprep.subr.bf16.mxu0 0
  %563 = vmatpush1.bf16.msra.mxu0 %v539
  %564 = vmatprep.subr.bf16.mxu0 0
  %565 = vmatpush1.bf16.msra.mxu0 0
  %566 = vmatprep.subr.bf16.mxu0 0
  %567 = vmatpush1.bf16.msra.mxu0 0
  %568 = vmatprep.subr.bf16.mxu0 0
  %569 = vmatpush1.bf16.msra.mxu0 0
  %570 = vmatprep.subr.bf16.mxu0 0
  %571 = vmatpush1.bf16.msra.mxu0 0
  %572 = vmatprep.subr.bf16.mxu0 0
  %573 = vmatpush1.bf16.msra.mxu0 0
  %574 = vmatprep.subr.bf16.mxu0 0
  %575 = vmatpush1.bf16.msra.mxu0 0
  %576 = vmatprep.subr.bf16.mxu0 0
  %577 = vmatpush1.bf16.msra.mxu0 0
  %578 = vmatprep.subr.bf16.mxu0 0
  %579 = vmatpush1.bf16.msra.mxu0 0
  %580 = vmatprep.mubr.bf16.mxu0 0
  %581 = vmatmul.mubr.bf16.gmra.mrb[0].mxu0 %v267
  %v582 = vpop.f32.mrb[0].mxu0
  %v583 = vadd.f32 %v438, %v582
  %v584 = vpop.f32.mrb[0].mxu0
  %v585 = vpop.f32.mrb[0].mxu0
  %v586 = vadd.f32 %v441, %v585
  %v587 = vpop.f32.mrb[0].mxu0
  %588 = vmatprep.mubr.bf16.mxu0 0
  %589 = vmatmul.mubr.bf16.gmra.mrb[0].mxu0 %v268
  %v590 = vpop.f32.mrb[0].mxu0
  %v591 = vadd.f32 %v446, %v590
  %v592 = vpop.f32.mrb[0].mxu0
  %v593 = vpop.f32.mrb[0].mxu0
  %v594 = vadd.f32 %v449, %v593
  %v595 = vpop.f32.mrb[0].mxu0
  %596 = vmatprep.mubr.bf16.mxu0 0
  %597 = vmatmul.mubr.bf16.gmra.mrb[0].mxu0 %v269
  %v598 = vpop.f32.mrb[0].mxu0
  %v599 = vadd.f32 %v454, %v598
  %v600 = vpop.f32.mrb[0].mxu0
  %v601 = vpop.f32.mrb[0].mxu0
  %v602 = vadd.f32 %v457, %v601
  %v603 = vpop.f32.mrb[0].mxu0
  %604 = vmatprep.mubr.bf16.mxu0 0
  %605 = vmatmul.mubr.bf16.gmra.mrb[0].mxu0 %v270
  %v606 = vpop.f32.mrb[0].mxu0
  %v607 = vadd.f32 %v462, %v606
  %v608 = vpop.f32.mrb[0].mxu0
  %v609 = vpop.f32.mrb[0].mxu0
  %v610 = vadd.f32 %v465, %v609
  %v611 = vpop.f32.mrb[0].mxu0
  %612 = vmatprep.mubr.bf16.mxu0 0
  %613 = vmatmul.mubr.bf16.gmra.mrb[0].mxu0 %v271
  %v614 = vpop.f32.mrb[0].mxu0
  %v615 = vadd.f32 %v470, %v614
  %v616 = vpop.f32.mrb[0].mxu0
  %v617 = vpop.f32.mrb[0].mxu0
  %v618 = vadd.f32 %v473, %v617
  %v619 = vpop.f32.mrb[0].mxu0
  %620 = vmatprep.mubr.bf16.mxu0 0
  %621 = vmatmul.mubr.bf16.gmra.mrb[0].mxu0 %v272
  %v622 = vpop.f32.mrb[0].mxu0
  %v623 = vadd.f32 %v478, %v622
  %v624 = vpop.f32.mrb[0].mxu0
  %v625 = vpop.f32.mrb[0].mxu0
  %v626 = vadd.f32 %v481, %v625
  %v627 = vpop.f32.mrb[0].mxu0
  %628 = vmatprep.mubr.bf16.mxu0 0
  %629 = vmatmul.mubr.bf16.gmra.mrb[0].mxu0 %v273
  %v630 = vpop.f32.mrb[0].mxu0
  %v631 = vadd.f32 %v486, %v630
  %v632 = vpop.f32.mrb[0].mxu0
  %v633 = vpop.f32.mrb[0].mxu0
  %v634 = vadd.f32 %v489, %v633
  %v635 = vpop.f32.mrb[0].mxu0
  %636 = vmatprep.mubr.bf16.mxu0 0
  %637 = vmatmul.mubr.bf16.gmra.mrb[0].mxu0 %v274
  %v638 = vpop.f32.mrb[0].mxu0
  %v639 = vadd.f32 %v494, %v638
  %v640 = vpop.f32.mrb[0].mxu0
  %v641 = vpop.f32.mrb[0].mxu0
  %v642 = vadd.f32 %v497, %v641
  %v643 = vpop.f32.mrb[0].mxu0
  %644 = vdwg.mxu0
  %v645 = vld [vmem:[%s4] sm:$0x1]
  %v647 = vlaneseq
  %v648 = vshrl.u32 %v647, 7
  %v649 = vsub.s32 0, %v648
  %v650 = vrot.slane %v645, %v649
  %v652 = vadd.f32 %v583, %v650
  %v653 = vadd.f32 %v586, %v650
  %v654 = vadd.f32 %v591, %v650
  %v655 = vadd.f32 %v594, %v650
  %v656 = vadd.f32 %v599, %v650
  %v657 = vadd.f32 %v602, %v650
  %v658 = vadd.f32 %v607, %v650
  %v659 = vadd.f32 %v610, %v650
  %v660 = vadd.f32 %v615, %v650
  %v661 = vadd.f32 %v618, %v650
  %v662 = vadd.f32 %v623, %v650
  %v663 = vadd.f32 %v626, %v650
  %v664 = vadd.f32 %v631, %v650
  %v665 = vadd.f32 %v634, %v650
  %v666 = vadd.f32 %v639, %v650
  %v667 = vadd.f32 %v642, %v650
  %v668 = vmax.f32 %v652, 0.0
  %v669 = vmax.f32 %v653, 0.0
  %v670 = vmax.f32 %v654, 0.0
  %v671 = vmax.f32 %v655, 0.0
  %v672 = vmax.f32 %v656, 0.0
  %v673 = vmax.f32 %v657, 0.0
  %v674 = vmax.f32 %v658, 0.0
  %v675 = vmax.f32 %v659, 0.0
  %v676 = vmax.f32 %v660, 0.0
  %v677 = vmax.f32 %v661, 0.0
  %v678 = vmax.f32 %v662, 0.0
  %v679 = vmax.f32 %v663, 0.0
  %v680 = vmax.f32 %v664, 0.0
  %v681 = vmax.f32 %v665, 0.0
  %v682 = vmax.f32 %v666, 0.0
  %v683 = vmax.f32 %v667, 0.0
  %v684 = vpack.c.bf16 %v669, %v668
  %v685 = vpack.c.bf16 %v671, %v670
  %v686 = vpack.c.bf16 %v673, %v672
  %v687 = vpack.c.bf16 %v675, %v674
  %v688 = vpack.c.bf16 %v677, %v676
  %v689 = vpack.c.bf16 %v679, %v678
  %v690 = vpack.c.bf16 %v681, %v680
  %v691 = vpack.c.bf16 %v683, %v682
  %v700 = vunpack.c.l.b16 %v684
  %v701 = vunpack.c.h.b16 %v684
  %v702 = vunpack.c.l.b16 %v685
  %v703 = vunpack.c.h.b16 %v685
  %v704 = vunpack.c.l.b16 %v686
  %v705 = vunpack.c.h.b16 %v686
  %v706 = vunpack.c.l.b16 %v687
  %v707 = vunpack.c.h.b16 %v687
  %v708 = vunpack.c.l.b16 %v688
  %v709 = vunpack.c.h.b16 %v688
  %v710 = vunpack.c.l.b16 %v689
  %v711 = vunpack.c.h.b16 %v689
  %v712 = vunpack.c.l.b16 %v690
  %v713 = vunpack.c.h.b16 %v690
  %v714 = vunpack.c.l.b16 %v691
  %v715 = vunpack.c.h.b16 %v691
  %v716 = vpack.c.b16 %v700, %v700
  %v717 = vpack.c.b16 %v701, %v701
  %v718 = vpack.c.b16 %v702, %v702
  %v719 = vpack.c.b16 %v703, %v703
  %v720 = vpack.c.b16 %v704, %v704
  %v721 = vpack.c.b16 %v705, %v705
  %v722 = vpack.c.b16 %v706, %v706
  %v723 = vpack.c.b16 %v707, %v707
  %v724 = vpack.c.b16 %v708, %v708
  %v725 = vpack.c.b16 %v709, %v709
  %v726 = vpack.c.b16 %v710, %v710
  %v727 = vpack.c.b16 %v711, %v711
  %v728 = vpack.c.b16 %v712, %v712
  %v729 = vpack.c.b16 %v713, %v713
  %v730 = vpack.c.b16 %v714, %v714
  %v731 = vpack.c.b16 %v715, %v715
  %748 = vst [vmem:[%s5] sm:$0xf] %v716
  %749 = vst [vmem:[%s5 + $0x4] sm:$0xf] %v717
  %750 = vst [vmem:[%s5 + $0x8] sm:$0xf] %v718
  %751 = vst [vmem:[%s5 + $0xc] sm:$0xf] %v719
  %752 = vst [vmem:[%s5 + $0x10] sm:$0xf] %v720
  %753 = vst [vmem:[%s5 + $0x14] sm:$0xf] %v721
  %754 = vst [vmem:[%s5 + $0x18] sm:$0xf] %v722
  %755 = vst [vmem:[%s5 + $0x1c] sm:$0xf] %v723
  %756 = vst [vmem:[%s5 + $0x20] sm:$0xf] %v724
  %757 = vst [vmem:[%s5 + $0x24] sm:$0xf] %v725
  %758 = vst [vmem:[%s5 + $0x28] sm:$0xf] %v726
  %759 = vst [vmem:[%s5 + $0x2c] sm:$0xf] %v727
  %760 = vst [vmem:[%s5 + $0x30] sm:$0xf] %v728
  %761 = vst [vmem:[%s5 + $0x34] sm:$0xf] %v729
  %762 = vst [vmem:[%s5 + $0x38] sm:$0xf] %v730
  %763 = vst [vmem:[%s5 + $0x3c] sm:$0xf] %v731
  // Predicated region
  $region22: #{graphsage_forward.2} parent=0 // pred_check
    _
  $region23: #{graphsage_forward.2} parent=0 // pred_check_branch
    %765 = sbr.rel (0) target = $region25
  $region24: #{graphsage_forward.2} parent=0 // pred_region
    _
  $region25: #{graphsage_forward.2} parent=0 // pred_fallthru
    _
  // Predicated region
  $region26: #{graphsage_forward.2} parent=0 // pred_check
    _
  $region27: #{graphsage_forward.2} parent=0 // pred_check_branch
    %767 = sbr.rel (0) target = $region29
  $region28: #{graphsage_forward.2} parent=0 // pred_region
    _
  $region29: #{graphsage_forward.2} parent=0 // pred_fallthru
    _

</llo_original>
